<compile_context>
chip_gen: v7x
topology: tpu7x:2x2x1
jax: 0.10.0
libtpu: 0.0.40
codegen_flags: <defaults>
</compile_context>

<pallas_src>
import functools

import jax
import jax.numpy as jnp
from jax.experimental import pallas as pl
from jax.experimental.pallas import tpu as pltpu

NEG_SLOPE = 0.01  # F.leaky_relu default
LANE = 128


def _leaky_relu(x):
    return jnp.maximum(x, NEG_SLOPE * x)


def _propagation_gcn_kernel(
    x_ref,    # (M, Fp)   bf16  node features of GB graphs (graph-major slab)
    a_ref,    # (M, M)    bf16  block-diagonal weighted adjacency, A[dst, src]
    rf2_ref,  # (GB, Op)  f32   hoisted  X[root_g] @ W2b               (one row/graph)
    ro_ref,   # (GB, Fp)  f32   hoisted  (A[root_g,:] @ (X@W1) + b1) @ WLb
    w1_ref,   # (Fp, Hp)  bf16  conv1 weight (x @ W form)
    b1_ref,   # (1, Hp)   f32
    w2a_ref,  # (Hp, Op)  bf16  conv2 weight rows acting on h1_activated
    b2_ref,   # (1, Op)   f32
    wla_ref,  # (Op, Fp)  bf16  output linear rows acting on h2_activated
    bl_ref,   # (1, Fp)   f32
    out_ref,  # (M, Fp)   f32
    *,
    gb,
    n_pad,
):
    m, fp = x_ref.shape
    op = rf2_ref.shape[-1]

    x = x_ref[...]
    a = a_ref[...]

    # conv1: h1 = A @ (X @ W1) + b1   (bf16 MXU operands, f32 accumulation)
    xw1 = jnp.dot(x, w1_ref[...], preferred_element_type=jnp.float32)
    h1 = jnp.dot(a, xw1.astype(jnp.bfloat16),
                 preferred_element_type=jnp.float32) + b1_ref[...]
    h1a = _leaky_relu(h1)

    # conv2 on cat([h1a, root_x]): A @ (h1a @ W2a + root_x @ W2b) + b2.
    # root_x @ W2b was precomputed in the wrapper; broadcast each graph's row to its
    # n_pad node rows before the block-diagonal aggregation (leading-axis reshape only).
    feat2 = jnp.dot(h1a.astype(jnp.bfloat16), w2a_ref[...],
                    preferred_element_type=jnp.float32)                  # (M, Op)
    feat2 = (feat2.reshape(gb, n_pad, op) + rf2_ref[...][:, None, :]).reshape(m, op)
    h2 = jnp.dot(a, feat2.astype(jnp.bfloat16),
                 preferred_element_type=jnp.float32) + b2_ref[...]
    h2a = _leaky_relu(h2)

    # output linear on cat([h2a, root_h1]) + leaky_relu (root_h1 @ WLb hoisted).
    out = jnp.dot(h2a.astype(jnp.bfloat16), wla_ref[...],
                  preferred_element_type=jnp.float32)                    # (M, Fp)
    out = (out.reshape(gb, n_pad, fp) + ro_ref[...][:, None, :]).reshape(m, fp)
    out_ref[...] = _leaky_relu(out + bl_ref[...])


@functools.partial(jax.jit, static_argnames=("gb", "n_pad"))
def propagation_gcn_layer(x_slabs, adj_slabs, rf2_rows, ro_rows, params, *, gb, n_pad):
    """Graph-batched blocked forward pass.

    x_slabs:   (S, M, Fp)  bf16   node-feature slab per grid step (M = gb * n_pad)
    adj_slabs: (S, M, M)   bf16   block-diagonal adjacency slab, A[dst, src]
    rf2_rows:  (S, gb, Op) f32    hoisted X[root_g] @ W2b rows
    ro_rows:   (S, gb, Fp) f32    hoisted root_h1_g @ WLb rows
    params:    dict of lane-padded bf16 weights / f32 biases
    returns:   (S, M, Fp)  f32
    """
    steps, m, fp = x_slabs.shape
    hp = params["w1"].shape[1]
    op = params["w2a"].shape[1]

    slab3 = lambda s: (s, 0, 0)
    fixed2 = lambda s: (0, 0)

    in_specs = [
        pl.BlockSpec((None, m, fp), slab3),      # x slab
        pl.BlockSpec((None, m, m), slab3),       # block-diagonal A slab
        pl.BlockSpec((None, gb, op), slab3),     # hoisted root_x @ W2b rows
        pl.BlockSpec((None, gb, fp), slab3),     # hoisted root_h1 @ WLb rows
        pl.BlockSpec((fp, hp), fixed2),          # w1
        pl.BlockSpec((1, hp), fixed2),           # b1
        pl.BlockSpec((hp, op), fixed2),          # w2a
        pl.BlockSpec((1, op), fixed2),           # b2
        pl.BlockSpec((op, fp), fixed2),          # wla
        pl.BlockSpec((1, fp), fixed2),           # bl
    ]
    out_spec = pl.BlockSpec((None, m, fp), slab3)

    # Advisory cost estimate (matmul flops + rough byte traffic).
    flops = 2 * steps * (
        m * fp * hp + m * m * hp        # conv1
        + m * hp * op + m * m * op      # conv2
        + m * op * fp                   # output linear
    )
    bytes_accessed = (
        x_slabs.size * 2 + adj_slabs.size * 2
        + rf2_rows.size * 4 + ro_rows.size * 4
        + sum(int(v.size) * v.dtype.itemsize for v in params.values())
        + steps * m * fp * 4
    )

    kernel = functools.partial(_propagation_gcn_kernel, gb=gb, n_pad=n_pad)

    return pl.pallas_call(
        kernel,
        out_shape=jax.ShapeDtypeStruct((steps, m, fp), jnp.float32),
        grid_spec=pltpu.PrefetchScalarGridSpec(
            num_scalar_prefetch=0,
            grid=(steps,),
            in_specs=in_specs,
            out_specs=out_spec,
        ),
        compiler_params=pltpu.CompilerParams(
            dimension_semantics=("parallel",),      # shard graph-batches across TCs on v7x
            vmem_limit_bytes=48 * 1024 * 1024,      # above 16/32 MiB defaults, safe on v7x
        ),
        cost_estimate=pl.CostEstimate(
            flops=int(flops), transcendentals=0, bytes_accessed=int(bytes_accessed)),
    )(x_slabs, adj_slabs, rf2_rows, ro_rows,
      params["w1"], params["b1"], params["w2a"], params["b2"],
      params["wla"], params["bl"])


def _reference(x, adj, root_per_node, p):
    """Pure-JAX f32 reference matching the PyTorch module (eval mode)."""
    h1 = adj @ (x @ p["w1"]) + p["b1"]
    h1a = jnp.maximum(h1, NEG_SLOPE * h1)
    root_x = x[root_per_node]
    h2 = adj @ (jnp.concatenate([h1a, root_x], axis=1) @ p["w2"]) + p["b2"]
    h2a = jnp.maximum(h2, NEG_SLOPE * h2)
    root_h1 = h1[root_per_node]
    out = jnp.concatenate([h2a, root_h1], axis=1) @ p["wl"] + p["bl"]
    return jnp.maximum(out, NEG_SLOPE * out)


if __name__ == "__main__":
    # Small synthetic problem: 16 propagation graphs, 16 nodes each.
    N_PER_GRAPH = 16
    N_GRAPHS = 16
    N = N_PER_GRAPH * N_GRAPHS          # 256 nodes total
    F_IN = 16                           # in_features
    HID = 32                            # hidden_features
    OUT = 16                            # out_features

    # 8 graphs per grid step -> slab M = 128 (multiple of 128: lane-dense A loads,
    # full MXU K), and 2 grid steps so the "parallel" axis can feed both TCs on v7x.
    GB = 8

    key = jax.random.PRNGKey(0)
    keys = jax.random.split(key, 10)

    # Node features
    x = jax.random.normal(keys[0], (N, F_IN), dtype=jnp.float32)

    # Edges: within each graph, node i <-> parent (i-1) (tree chain). No cross-graph edges.
    srcs, dsts = [], []
    for g in range(N_GRAPHS):
        base = g * N_PER_GRAPH
        for i in range(1, N_PER_GRAPH):
            srcs += [base + i, base + i - 1]
            dsts += [base + i - 1, base + i]
    edge_index = jnp.array([srcs, dsts], dtype=jnp.int32)        # (2, E)
    E = edge_index.shape[1]
    edge_weight = jax.random.uniform(keys[1], (E,), dtype=jnp.float32) + 0.5

    # Roots (global node indices, varied local positions) and node->graph map.
    root_local = jnp.arange(N_GRAPHS, dtype=jnp.int32) % N_PER_GRAPH
    root_indices_in_batch = jnp.arange(N_GRAPHS, dtype=jnp.int32) * N_PER_GRAPH + root_local
    batch_vector = jnp.repeat(jnp.arange(N_GRAPHS, dtype=jnp.int32), N_PER_GRAPH)

    # --- deterministic parameter init (shapes per module __init__) ---
    def _init(k, shape, fan_in):
        bound = 1.0 / jnp.sqrt(jnp.float32(fan_in))
        return jax.random.uniform(k, shape, jnp.float32, -bound, bound)

    params_f32 = {
        "w1": _init(keys[2], (F_IN, HID), F_IN),                  # conv1 weight (x @ W form)
        "b1": _init(keys[3], (1, HID), F_IN),
        "w2": _init(keys[4], (HID + F_IN, OUT), HID + F_IN),      # conv2 weight
        "b2": _init(keys[5], (1, OUT), HID + F_IN),
        "wl": _init(keys[7], (OUT + HID, F_IN), OUT + HID),       # linear weight (pre-transposed)
        "bl": _init(keys[8], (1, F_IN), OUT + HID),
    }

    # --- f32 reference on the original global layout ---
    adj_global = jnp.zeros((N, N), jnp.float32).at[edge_index[1], edge_index[0]].add(edge_weight)
    root_per_node = root_indices_in_batch[batch_vector]           # (N,)
    ref = _reference(x, adj_global, root_per_node, params_f32)

    # --- kernel-side preparation -------------------------------------------------
    def _round_up(v, m):
        return (v + m - 1) // m * m

    n_pad = _round_up(N_PER_GRAPH, 16)      # per-graph node rows (bf16 sublane multiple)
    fp = _round_up(F_IN, LANE)
    hp = _round_up(HID, LANE)
    op = _round_up(OUT, LANE)
    g_padded = _round_up(N_GRAPHS, GB)      # pad with empty graphs if needed
    steps = g_padded // GB
    m_slab = GB * n_pad                     # per-step slab rows (multiple of 128)

    # Node features: per-graph blocks -> graph-major slab per grid step.
    x_blocks = jnp.zeros((g_padded, n_pad, fp), jnp.float32)
    x_blocks = x_blocks.at[:N_GRAPHS, :N_PER_GRAPH, :F_IN].set(
        x.reshape(N_GRAPHS, N_PER_GRAPH, F_IN))
    x_slabs = x_blocks.reshape(steps, m_slab, fp).astype(jnp.bfloat16)

    # Per-graph adjacency blocks (graphs are disjoint), packed block-diagonally into
    # one (M, M) bf16 slab per grid step -> single lane-dense MXU aggregation.
    adj_blocks = jnp.zeros((g_padded, n_pad, n_pad), jnp.float32)
    for g in range(N_GRAPHS):
        lo, hi = g * N_PER_GRAPH, (g + 1) * N_PER_GRAPH
        adj_blocks = adj_blocks.at[g, :N_PER_GRAPH, :N_PER_GRAPH].set(adj_global[lo:hi, lo:hi])
    eye_gb = jnp.eye(GB, dtype=jnp.float32)
    adj_slabs = jnp.einsum(
        "sgij,gh->sgihj", adj_blocks.reshape(steps, GB, n_pad, n_pad), eye_gb
    ).reshape(steps, m_slab, m_slab).astype(jnp.bfloat16)

    # Hoisted root-row GEMMs (input-only, f32, batched over all graphs).
    xw1_f32 = x @ params_f32["w1"]                                              # (N, HID)
    h1_root = adj_global[root_indices_in_batch] @ xw1_f32 + params_f32["b1"]    # (G, HID)
    root_feat2 = x[root_indices_in_batch] @ params_f32["w2"][HID:, :]           # (G, OUT)
    root_out = h1_root @ params_f32["wl"][OUT:, :]                              # (G, F_IN)

    rf2_rows = jnp.zeros((g_padded, op), jnp.float32).at[:N_GRAPHS, :OUT].set(root_feat2)
    rf2_rows = rf2_rows.reshape(steps, GB, op)
    ro_rows = jnp.zeros((g_padded, fp), jnp.float32).at[:N_GRAPHS, :F_IN].set(root_out)
    ro_rows = ro_rows.reshape(steps, GB, fp)

    # Lane-padded weights (zero-padding is exact: padded rows/cols contribute 0).
    def _pad2(a, rows, cols, dtype):
        return jnp.zeros((rows, cols), dtype).at[: a.shape[0], : a.shape[1]].set(a.astype(dtype))

    params = {
        "w1":  _pad2(params_f32["w1"], fp, hp, jnp.bfloat16),
        "b1":  _pad2(params_f32["b1"], 1, hp, jnp.float32),
        "w2a": _pad2(params_f32["w2"][:HID, :], hp, op, jnp.bfloat16),   # acts on h1_activated
        "b2":  _pad2(params_f32["b2"], 1, op, jnp.float32),
        "wla": _pad2(params_f32["wl"][:OUT, :], op, fp, jnp.bfloat16),   # acts on h2_activated
        "bl":  _pad2(params_f32["bl"], 1, fp, jnp.float32),
    }

    out_slabs = propagation_gcn_layer(
        x_slabs, adj_slabs, rf2_rows, ro_rows, params, gb=GB, n_pad=n_pad)
    out_slabs = jax.block_until_ready(out_slabs)

    out = out_slabs.reshape(g_padded, n_pad, fp)[:N_GRAPHS, :N_PER_GRAPH, :F_IN]
    out = out.reshape(N, F_IN)

    assert out.shape == (N, F_IN)
    # bf16 MXU operands vs. f32 reference: loosened tolerance (accepted precision tradeoff).
    err = float(jnp.max(jnp.abs(out - ref)))
    assert err < 5e-2, f"max abs err {err}"

    print("KERNEL_OK")
</pallas_src>

<mosaic_0001>
module attributes {stable_mosaic.version = 11 : i64} {
  func.func @_propagation_gcn_kernel(%arg0: i32, %arg1: memref<1x128x128xbf16, #tpu.memory_space<vmem>>, %arg2: memref<1x128x128xbf16, #tpu.memory_space<vmem>>, %arg3: memref<1x8x128xf32, #tpu.memory_space<vmem>>, %arg4: memref<1x8x128xf32, #tpu.memory_space<vmem>>, %arg5: memref<128x128xbf16, #tpu.memory_space<vmem>>, %arg6: memref<1x128xf32, #tpu.memory_space<vmem>>, %arg7: memref<128x128xbf16, #tpu.memory_space<vmem>>, %arg8: memref<1x128xf32, #tpu.memory_space<vmem>>, %arg9: memref<128x128xbf16, #tpu.memory_space<vmem>>, %arg10: memref<1x128xf32, #tpu.memory_space<vmem>>, %arg11: memref<1x128x128xf32, #tpu.memory_space<vmem>>) attributes {dimension_semantics = [#tpu.dimension_semantics<parallel>], iteration_bounds = array<i64: 2>, scalar_prefetch = 0 : i64, scratch_operands = 0 : i64, tpu.core_type = #tpu.core_type<tc>, window_params = [{transform_indices = @transform_0, window_bounds = array<i64: 1, 128, 128>}, {transform_indices = @transform_1, window_bounds = array<i64: 1, 128, 128>}, {transform_indices = @transform_2, window_bounds = array<i64: 1, 8, 128>}, {transform_indices = @transform_3, window_bounds = array<i64: 1, 8, 128>}, {pipeline_mode = #tpu.pipeline_mode<synchronous>, transform_indices = @transform_4, window_bounds = array<i64: 128, 128>}, {pipeline_mode = #tpu.pipeline_mode<synchronous>, transform_indices = @transform_5, window_bounds = array<i64: 1, 128>}, {pipeline_mode = #tpu.pipeline_mode<synchronous>, transform_indices = @transform_6, window_bounds = array<i64: 128, 128>}, {pipeline_mode = #tpu.pipeline_mode<synchronous>, transform_indices = @transform_7, window_bounds = array<i64: 1, 128>}, {pipeline_mode = #tpu.pipeline_mode<synchronous>, transform_indices = @transform_8, window_bounds = array<i64: 128, 128>}, {pipeline_mode = #tpu.pipeline_mode<synchronous>, transform_indices = @transform_9, window_bounds = array<i64: 1, 128>}, {transform_indices = @transform_10, window_bounds = array<i64: 1, 128, 128>}]} {
    %c0 = arith.constant 0 : index
    %c0_0 = arith.constant 0 : index
    %c0_1 = arith.constant 0 : index
    %0 = vector.load %arg1[%c0, %c0_0, %c0_1] : memref<1x128x128xbf16, #tpu.memory_space<vmem>>, vector<1x128x128xbf16>
    %1 = vector.shape_cast %0 : vector<1x128x128xbf16> to vector<128x128xbf16>
    %c0_2 = arith.constant 0 : index
    %c0_3 = arith.constant 0 : index
    %c0_4 = arith.constant 0 : index
    %2 = vector.load %arg2[%c0_2, %c0_3, %c0_4] : memref<1x128x128xbf16, #tpu.memory_space<vmem>>, vector<1x128x128xbf16>
    %3 = vector.shape_cast %2 : vector<1x128x128xbf16> to vector<128x128xbf16>
    %c0_5 = arith.constant 0 : index
    %c0_6 = arith.constant 0 : index
    %4 = vector.load %arg5[%c0_5, %c0_6] : memref<128x128xbf16, #tpu.memory_space<vmem>>, vector<128x128xbf16>
    %cst = arith.constant dense<0.000000e+00> : vector<128x128xf32>
    %5 = tpu.matmul %1, %4, %cst {dimension_numbers = #tpu.dot_dimension_numbers<[1], [0], [0], [1], [0, 0, 1, 1], [], []>} : vector<128x128xbf16>, vector<128x128xbf16>, vector<128x128xf32> -> vector<128x128xf32>
    %6 = arith.truncf %5 : vector<128x128xf32> to vector<128x128xbf16>
    %cst_7 = arith.constant dense<0.000000e+00> : vector<128x128xf32>
    %7 = tpu.matmul %3, %6, %cst_7 {dimension_numbers = #tpu.dot_dimension_numbers<[1], [0], [0], [1], [0, 0, 1, 1], [], []>} : vector<128x128xbf16>, vector<128x128xbf16>, vector<128x128xf32> -> vector<128x128xf32>
    %c0_8 = arith.constant 0 : index
    %c0_9 = arith.constant 0 : index
    %8 = vector.load %arg6[%c0_8, %c0_9] : memref<1x128xf32, #tpu.memory_space<vmem>>, vector<1x128xf32>
    %9 = vector.broadcast %8 : vector<1x128xf32> to vector<128x128xf32>
    %10 = arith.addf %7, %9 : vector<128x128xf32>
    %cst_10 = arith.constant 0.00999999977 : f32
    %11 = vector.broadcast %cst_10 : f32 to vector<128x128xf32>
    %12 = arith.mulf %11, %10 : vector<128x128xf32>
    %13 = arith.maximumf %10, %12 : vector<128x128xf32>
    %14 = arith.truncf %13 : vector<128x128xf32> to vector<128x128xbf16>
    %c0_11 = arith.constant 0 : index
    %c0_12 = arith.constant 0 : index
    %15 = vector.load %arg7[%c0_11, %c0_12] : memref<128x128xbf16, #tpu.memory_space<vmem>>, vector<128x128xbf16>
    %cst_13 = arith.constant dense<0.000000e+00> : vector<128x128xf32>
    %16 = tpu.matmul %14, %15, %cst_13 {dimension_numbers = #tpu.dot_dimension_numbers<[1], [0], [0], [1], [0, 0, 1, 1], [], []>} : vector<128x128xbf16>, vector<128x128xbf16>, vector<128x128xf32> -> vector<128x128xf32>
    %17 = vector.shape_cast %16 : vector<128x128xf32> to vector<8x16x128xf32>
    %c0_14 = arith.constant 0 : index
    %c0_15 = arith.constant 0 : index
    %c0_16 = arith.constant 0 : index
    %18 = vector.load %arg3[%c0_14, %c0_15, %c0_16] : memref<1x8x128xf32, #tpu.memory_space<vmem>>, vector<1x8x128xf32>
    %19 = vector.shape_cast %18 : vector<1x8x128xf32> to vector<8x128xf32>
    %20 = vector.shape_cast %19 : vector<8x128xf32> to vector<8x1x128xf32>
    %21 = vector.broadcast %20 : vector<8x1x128xf32> to vector<8x16x128xf32>
    %22 = arith.addf %17, %21 : vector<8x16x128xf32>
    %23 = vector.shape_cast %22 : vector<8x16x128xf32> to vector<128x128xf32>
    %24 = arith.truncf %23 : vector<128x128xf32> to vector<128x128xbf16>
    %cst_17 = arith.constant dense<0.000000e+00> : vector<128x128xf32>
    %25 = tpu.matmul %3, %24, %cst_17 {dimension_numbers = #tpu.dot_dimension_numbers<[1], [0], [0], [1], [0, 0, 1, 1], [], []>} : vector<128x128xbf16>, vector<128x128xbf16>, vector<128x128xf32> -> vector<128x128xf32>
    %c0_18 = arith.constant 0 : index
    %c0_19 = arith.constant 0 : index
    %26 = vector.load %arg8[%c0_18, %c0_19] : memref<1x128xf32, #tpu.memory_space<vmem>>, vector<1x128xf32>
    %27 = vector.broadcast %26 : vector<1x128xf32> to vector<128x128xf32>
    %28 = arith.addf %25, %27 : vector<128x128xf32>
    %cst_20 = arith.constant 0.00999999977 : f32
    %29 = vector.broadcast %cst_20 : f32 to vector<128x128xf32>
    %30 = arith.mulf %29, %28 : vector<128x128xf32>
    %31 = arith.maximumf %28, %30 : vector<128x128xf32>
    %32 = arith.truncf %31 : vector<128x128xf32> to vector<128x128xbf16>
    %c0_21 = arith.constant 0 : index
    %c0_22 = arith.constant 0 : index
    %33 = vector.load %arg9[%c0_21, %c0_22] : memref<128x128xbf16, #tpu.memory_space<vmem>>, vector<128x128xbf16>
    %cst_23 = arith.constant dense<0.000000e+00> : vector<128x128xf32>
    %34 = tpu.matmul %32, %33, %cst_23 {dimension_numbers = #tpu.dot_dimension_numbers<[1], [0], [0], [1], [0, 0, 1, 1], [], []>} : vector<128x128xbf16>, vector<128x128xbf16>, vector<128x128xf32> -> vector<128x128xf32>
    %35 = vector.shape_cast %34 : vector<128x128xf32> to vector<8x16x128xf32>
    %c0_24 = arith.constant 0 : index
    %c0_25 = arith.constant 0 : index
    %c0_26 = arith.constant 0 : index
    %36 = vector.load %arg4[%c0_24, %c0_25, %c0_26] : memref<1x8x128xf32, #tpu.memory_space<vmem>>, vector<1x8x128xf32>
    %37 = vector.shape_cast %36 : vector<1x8x128xf32> to vector<8x128xf32>
    %38 = vector.shape_cast %37 : vector<8x128xf32> to vector<8x1x128xf32>
    %39 = vector.broadcast %38 : vector<8x1x128xf32> to vector<8x16x128xf32>
    %40 = arith.addf %35, %39 : vector<8x16x128xf32>
    %41 = vector.shape_cast %40 : vector<8x16x128xf32> to vector<128x128xf32>
    %c0_27 = arith.constant 0 : index
    %c0_28 = arith.constant 0 : index
    %42 = vector.load %arg10[%c0_27, %c0_28] : memref<1x128xf32, #tpu.memory_space<vmem>>, vector<1x128xf32>
    %43 = vector.broadcast %42 : vector<1x128xf32> to vector<128x128xf32>
    %44 = arith.addf %41, %43 : vector<128x128xf32>
    %cst_29 = arith.constant 0.00999999977 : f32
    %45 = vector.broadcast %cst_29 : f32 to vector<128x128xf32>
    %46 = arith.mulf %45, %44 : vector<128x128xf32>
    %47 = arith.maximumf %44, %46 : vector<128x128xf32>
    %c0_30 = arith.constant 0 : index
    %c0_31 = arith.constant 0 : index
    %c0_32 = arith.constant 0 : index
    %48 = vector.load %arg11[%c0_30, %c0_31, %c0_32] : memref<1x128x128xf32, #tpu.memory_space<vmem>>, vector<1x128x128xf32>
    %49 = vector.shape_cast %48 : vector<1x128x128xf32> to vector<128x128xf32>
    %50 = vector.shape_cast %47 : vector<128x128xf32> to vector<1x128x128xf32>
    tpu.vector_store %arg11[%c0_30, %c0_31, %c0_32], %50 {strides = array<i32>} : memref<1x128x128xf32, #tpu.memory_space<vmem>>, vector<1x128x128xf32>,
    return
  }
  func.func @transform_0(%arg0: i32) -> (i32, i32, i32) {
    %c0_i32 = arith.constant 0 : i32
    %c0_i32_0 = arith.constant 0 : i32
    %c0_i32_1 = arith.constant 0 : i32
    return %arg0, %c0_i32, %c0_i32_0 : i32, i32, i32
  }
  func.func @transform_1(%arg0: i32) -> (i32, i32, i32) {
    %c0_i32 = arith.constant 0 : i32
    %c0_i32_0 = arith.constant 0 : i32
    %c0_i32_1 = arith.constant 0 : i32
    return %arg0, %c0_i32, %c0_i32_0 : i32, i32, i32
  }
  func.func @transform_2(%arg0: i32) -> (i32, i32, i32) {
    %c0_i32 = arith.constant 0 : i32
    %c0_i32_0 = arith.constant 0 : i32
    %c0_i32_1 = arith.constant 0 : i32
    return %arg0, %c0_i32, %c0_i32_0 : i32, i32, i32
  }
  func.func @transform_3(%arg0: i32) -> (i32, i32, i32) {
    %c0_i32 = arith.constant 0 : i32
    %c0_i32_0 = arith.constant 0 : i32
    %c0_i32_1 = arith.constant 0 : i32
    return %arg0, %c0_i32, %c0_i32_0 : i32, i32, i32
  }
  func.func @transform_4(%arg0: i32) -> (i32, i32) {
    %c0_i32 = arith.constant 0 : i32
    %c0_i32_0 = arith.constant 0 : i32
    %c0_i32_1 = arith.constant 0 : i32
    return %c0_i32, %c0_i32_0 : i32, i32
  }
  func.func @transform_5(%arg0: i32) -> (i32, i32) {
    %c0_i32 = arith.constant 0 : i32
    %c0_i32_0 = arith.constant 0 : i32
    %c0_i32_1 = arith.constant 0 : i32
    return %c0_i32, %c0_i32_0 : i32, i32
  }
  func.func @transform_6(%arg0: i32) -> (i32, i32) {
    %c0_i32 = arith.constant 0 : i32
    %c0_i32_0 = arith.constant 0 : i32
    %c0_i32_1 = arith.constant 0 : i32
    return %c0_i32, %c0_i32_0 : i32, i32
  }
  func.func @transform_7(%arg0: i32) -> (i32, i32) {
    %c0_i32 = arith.constant 0 : i32
    %c0_i32_0 = arith.constant 0 : i32
    %c0_i32_1 = arith.constant 0 : i32
    return %c0_i32, %c0_i32_0 : i32, i32
  }
  func.func @transform_8(%arg0: i32) -> (i32, i32) {
    %c0_i32 = arith.constant 0 : i32
    %c0_i32_0 = arith.constant 0 : i32
    %c0_i32_1 = arith.constant 0 : i32
    return %c0_i32, %c0_i32_0 : i32, i32
  }
  func.func @transform_9(%arg0: i32) -> (i32, i32) {
    %c0_i32 = arith.constant 0 : i32
    %c0_i32_0 = arith.constant 0 : i32
    %c0_i32_1 = arith.constant 0 : i32
    return %c0_i32, %c0_i32_0 : i32, i32
  }
  func.func @transform_10(%arg0: i32) -> (i32, i32, i32) {
    %c0_i32 = arith.constant 0 : i32
    %c0_i32_0 = arith.constant 0 : i32
    %c0_i32_1 = arith.constant 0 : i32
    return %arg0, %c0_i32, %c0_i32_0 : i32, i32, i32
  }
}

</mosaic_0001>

<llo_original>
// kernel: propagation_gcn_layer.1
$region0: #{propagation_gcn_layer.1}
  #allocation0 [shape = 'u32[]', space=smem, size = 0x4, offset = 0x4, fixed_abs, tag = 'smem constant byte address 0x4 - core index']
  #allocation1 [shape = 'u32[144,128]{1,0:T(1,128)}', space=vmem, size = 0x12000, scoped, tag = 'internal scratch']
  %s0 = inlined_call_operand.hbm [shape: bf16[2,128,128], index: 0, kind: input, shape index: {}]
  %s1 = inlined_call_operand.hbm [shape: bf16[2,128,128], index: 1, kind: input, shape index: {}]
  %s2 = inlined_call_operand.hbm [shape: f32[2,8,128], index: 2, kind: input, shape index: {}]
  %s3 = inlined_call_operand.hbm [shape: f32[2,8,128], index: 3, kind: input, shape index: {}]
  %s4 = inlined_call_operand.hbm [shape: bf16[128,128], index: 4, kind: input, shape index: {}]
  %s5 = inlined_call_operand.vmem [shape: f32[1,128], index: 5, kind: input, shape index: {}]
  %s6 = inlined_call_operand.hbm [shape: bf16[128,128], index: 6, kind: input, shape index: {}]
  %s7 = inlined_call_operand.vmem [shape: f32[1,128], index: 7, kind: input, shape index: {}]
  %s8 = inlined_call_operand.hbm [shape: bf16[128,128], index: 8, kind: input, shape index: {}]
  %s9 = inlined_call_operand.vmem [shape: f32[1,128], index: 9, kind: input, shape index: {}]
  %s10 = inlined_call_operand.hbm [shape: f32[2,128,128], index: 10, kind: output, shape index: {}]
  %s11 = sld [smem:[#allocation0]]
  $region101: #{propagation_gcn_layer.1} parent=0
    _
  %s13 = ssub.s32 1, %s11
  %s14 = scalar_select 0, %s13, %s11
  $region1: #{propagation_gcn_layer.1} parent=0
    #allocation2 [shape = 'u8[65536]{0}', space=vmem, size = 0x10000, scoped, tag = 'input window, operand 0']
    #allocation3 [shape = 's32[2]{0}', space=sflag, size = 0x8, scoped, tag = 'scoped memory for propagation_gcn_layer.1']
    #allocation4 [shape = 's32[2]{0}', space=sflag, size = 0x8, scoped, tag = 'scoped memory for propagation_gcn_layer.1']
    #allocation5 [shape = 'u8[65536]{0}', space=vmem, size = 0x10000, scoped, tag = 'input window, operand 1']
    #allocation6 [shape = 's32[2]{0}', space=sflag, size = 0x8, scoped, tag = 'scoped memory for propagation_gcn_layer.1']
    #allocation7 [shape = 'u8[8192]{0}', space=vmem, size = 0x2000, scoped, tag = 'input window, operand 2']
    #allocation8 [shape = 'u8[8192]{0}', space=vmem, size = 0x2000, scoped, tag = 'input window, operand 3']
    #allocation9 [shape = 's32[2]{0}', space=sflag, size = 0x8, scoped, tag = 'scoped memory for propagation_gcn_layer.1']
    #allocation10 [shape = 'u8[32768]{0}', space=vmem, size = 0x8000, scoped, tag = 'input window, operand 4, single buffered']
    #allocation11 [shape = 'u8[32768]{0}', space=vmem, size = 0x8000, scoped, tag = 'input window, operand 6, single buffered']
    #allocation12 [shape = 's32[1]{0}', space=sflag, size = 0x4, scoped, tag = 'scoped memory for propagation_gcn_layer.1']
    #allocation13 [shape = 'u8[32768]{0}', space=vmem, size = 0x8000, scoped, tag = 'input window, operand 8, single buffered']
    #allocation14 [shape = 'u8[131072]{0}', space=vmem, size = 0x20000, scoped, tag = 'output window, operand 0']
    %15 = vsyncpa [#allocation3], 0
    %s16 = scalar_lea.sflag [#allocation3], 1
    %17 = vsyncpa %s16, 0
    %18 = vsyncpa [#allocation6], 0
    %s19 = scalar_lea.sflag [#allocation6], 1
    %20 = vsyncpa %s19, 0
    %21 = vsyncpa [#allocation9], 0
    %s22 = scalar_lea.sflag [#allocation9], 1
    %23 = vsyncpa %s22, 0
    %24 = vsyncpa [#allocation12], 0
    %25 = vsyncpa [#allocation4], 0
    %s26 = scalar_lea.sflag [#allocation4], 1
    %27 = vsyncpa %s26, 0
    loop: start=0, step=1, limit=4
    $region2: #{propagation_gcn_layer.1} parent=1 // loop_pre_header
      _
    $region3: #{propagation_gcn_layer.1} parent=1 // loop_header
      %s29 = sphi 0, %s33
      %p30 = scmp.ge.s32.totalorder %s29, 4
      %s39 = sphi 0, %s41
      %s42 = sphi 0, %s39
      %s43 = sphi 0, %s42
      %s59 = sphi 0, %s43
      %s65 = sphi 0, %s67
      %s68 = sphi 0, %s65
      %s69 = sphi 0, %s68
      %s85 = sphi 0, %s69
      %s91 = sphi 0, %s93
      %s94 = sphi 0, %s91
      %s95 = sphi 0, %s94
      %s111 = sphi 0, %s95
      %s117 = sphi 0, %s119
      %s120 = sphi 0, %s117
      %s121 = sphi 0, %s120
      %s137 = sphi 0, %s121
      %s141 = sphi 0, %s141
      %s143 = sphi 0, %s141
      %s144 = sphi 0, %s143
      %s158 = sphi 0, %s144
      %s162 = sphi 0, %s162
      %s164 = sphi 0, %s162
      %s165 = sphi 0, %s164
      %s179 = sphi 0, %s165
      %s183 = sphi 0, %s183
      %s185 = sphi 0, %s183
      %s186 = sphi 0, %s185
      %s200 = sphi 0, %s186
      %s204 = sphi 0, %s204
      %s206 = sphi 0, %s204
      %s207 = sphi 0, %s206
      %s221 = sphi 0, %s207
      %s225 = sphi 0, %s225
      %s227 = sphi 0, %s225
      %s228 = sphi 0, %s227
      %s242 = sphi 0, %s228
      %s246 = sphi 0, %s246
      %s248 = sphi 0, %s246
      %s249 = sphi 0, %s248
      %s263 = sphi 0, %s249
      %s269 = sphi 0, %s271
      %s272 = sphi 0, %s269
      %s273 = sphi 0, %s272
      %s289 = sphi 0, %s273
    $region4: #{propagation_gcn_layer.1} parent=1 // loop_header_branch
      %32 = sbr.rel (%p30) target = $region8
    $region5: #{propagation_gcn_layer.1} parent=1 // loop_body
      %s34 = ssub.s32 %s29, 1
      %s35 = ssub.s32 %s29, 2
      %s36 = sadd.s32 %s29, 1
      %s37 = ssub.s32 %s29, %s36
      %p38 = scmp.eq.s32.totalorder %s37, 0
      %s40 = sadd.s32 %s39, 1
      %s41 = scalar_select %p38, %s39, %s40
      %p44 = pneg %p38
      %p45 = scmp.eq.s32.totalorder %s29, 1
      %p46 = por %p44, %p45
      %p47 = scmp.ne.s32.totalorder %s39, %s42
      %p48 = scmp.eq.s32.totalorder %s29, 0
      %p49 = por %p47, %p48
      %p50 = scmp.ne.s32.totalorder %s39, %s42
      %p51 = scmp.eq.s32.totalorder %s34, 1
      %p52 = por %p50, %p51
      %p53 = scmp.ne.s32.totalorder %s42, %s43
      %p54 = scmp.eq.s32.totalorder %s34, 0
      %p55 = por %p53, %p54
      %p56 = scmp.ne.s32.totalorder %s42, %s43
      %p57 = scmp.eq.s32.totalorder %s35, 1
      %p58 = por %p56, %p57
      %p60 = scmp.ne.s32.totalorder %s43, %s59
      %p61 = scmp.eq.s32.totalorder %s35, 0
      %p62 = por %p60, %p61
      %s63 = ssub.s32 %s29, %s36
      %p64 = scmp.eq.s32.totalorder %s63, 0
      %s66 = sadd.s32 %s65, 1
      %s67 = scalar_select %p64, %s65, %s66
      %p70 = pneg %p64
      %p71 = scmp.eq.s32.totalorder %s29, 1
      %p72 = por %p70, %p71
      %p73 = scmp.ne.s32.totalorder %s65, %s68
      %p74 = scmp.eq.s32.totalorder %s29, 0
      %p75 = por %p73, %p74
      %p76 = scmp.ne.s32.totalorder %s65, %s68
      %p77 = scmp.eq.s32.totalorder %s34, 1
      %p78 = por %p76, %p77
      %p79 = scmp.ne.s32.totalorder %s68, %s69
      %p80 = scmp.eq.s32.totalorder %s34, 0
      %p81 = por %p79, %p80
      %p82 = scmp.ne.s32.totalorder %s68, %s69
      %p83 = scmp.eq.s32.totalorder %s35, 1
      %p84 = por %p82, %p83
      %p86 = scmp.ne.s32.totalorder %s69, %s85
      %p87 = scmp.eq.s32.totalorder %s35, 0
      %p88 = por %p86, %p87
      %s89 = ssub.s32 %s29, %s36
      %p90 = scmp.eq.s32.totalorder %s89, 0
      %s92 = sadd.s32 %s91, 1
      %s93 = scalar_select %p90, %s91, %s92
      %p96 = pneg %p90
      %p97 = scmp.eq.s32.totalorder %s29, 1
      %p98 = por %p96, %p97
      %p99 = scmp.ne.s32.totalorder %s91, %s94
      %p100 = scmp.eq.s32.totalorder %s29, 0
      %p101 = por %p99, %p100
      %p102 = scmp.ne.s32.totalorder %s91, %s94
      %p103 = scmp.eq.s32.totalorder %s34, 1
      %p104 = por %p102, %p103
      %p105 = scmp.ne.s32.totalorder %s94, %s95
      %p106 = scmp.eq.s32.totalorder %s34, 0
      %p107 = por %p105, %p106
      %p108 = scmp.ne.s32.totalorder %s94, %s95
      %p109 = scmp.eq.s32.totalorder %s35, 1
      %p110 = por %p108, %p109
      %p112 = scmp.ne.s32.totalorder %s95, %s111
      %p113 = scmp.eq.s32.totalorder %s35, 0
      %p114 = por %p112, %p113
      %s115 = ssub.s32 %s29, %s36
      %p116 = scmp.eq.s32.totalorder %s115, 0
      %s118 = sadd.s32 %s117, 1
      %s119 = scalar_select %p116, %s117, %s118
      %p122 = pneg %p116
      %p123 = scmp.eq.s32.totalorder %s29, 1
      %p124 = por %p122, %p123
      %p125 = scmp.ne.s32.totalorder %s117, %s120
      %p126 = scmp.eq.s32.totalorder %s29, 0
      %p127 = por %p125, %p126
      %p128 = scmp.ne.s32.totalorder %s117, %s120
      %p129 = scmp.eq.s32.totalorder %s34, 1
      %p130 = por %p128, %p129
      %p131 = scmp.ne.s32.totalorder %s120, %s121
      %p132 = scmp.eq.s32.totalorder %s34, 0
      %p133 = por %p131, %p132
      %p134 = scmp.ne.s32.totalorder %s120, %s121
      %p135 = scmp.eq.s32.totalorder %s35, 1
      %p136 = por %p134, %p135
      %p138 = scmp.ne.s32.totalorder %s121, %s137
      %p139 = scmp.eq.s32.totalorder %s35, 0
      %p140 = por %p138, %p139
      %s142 = sadd.s32 %s141, 1
      %p145 = scmp.eq.s32.totalorder %s29, 1
      %p146 = scmp.ne.s32.totalorder %s141, %s143
      %p147 = scmp.eq.s32.totalorder %s29, 0
      %p148 = por %p146, %p147
      %p149 = scmp.ne.s32.totalorder %s141, %s143
      %p150 = scmp.eq.s32.totalorder %s34, 1
      %p151 = por %p149, %p150
      %p152 = scmp.ne.s32.totalorder %s143, %s144
      %p153 = scmp.eq.s32.totalorder %s34, 0
      %p154 = por %p152, %p153
      %p155 = scmp.ne.s32.totalorder %s143, %s144
      %p156 = scmp.eq.s32.totalorder %s35, 1
      %p157 = por %p155, %p156
      %p159 = scmp.ne.s32.totalorder %s144, %s158
      %p160 = scmp.eq.s32.totalorder %s35, 0
      %p161 = por %p159, %p160
      %s163 = sadd.s32 %s162, 1
      %p166 = scmp.eq.s32.totalorder %s29, 1
      %p167 = scmp.ne.s32.totalorder %s162, %s164
      %p168 = scmp.eq.s32.totalorder %s29, 0
      %p169 = por %p167, %p168
      %p170 = scmp.ne.s32.totalorder %s162, %s164
      %p171 = scmp.eq.s32.totalorder %s34, 1
      %p172 = por %p170, %p171
      %p173 = scmp.ne.s32.totalorder %s164, %s165
      %p174 = scmp.eq.s32.totalorder %s34, 0
      %p175 = por %p173, %p174
      %p176 = scmp.ne.s32.totalorder %s164, %s165
      %p177 = scmp.eq.s32.totalorder %s35, 1
      %p178 = por %p176, %p177
      %p180 = scmp.ne.s32.totalorder %s165, %s179
      %p181 = scmp.eq.s32.totalorder %s35, 0
      %p182 = por %p180, %p181
      %s184 = sadd.s32 %s183, 1
      %p187 = scmp.eq.s32.totalorder %s29, 1
      %p188 = scmp.ne.s32.totalorder %s183, %s185
      %p189 = scmp.eq.s32.totalorder %s29, 0
      %p190 = por %p188, %p189
      %p191 = scmp.ne.s32.totalorder %s183, %s185
      %p192 = scmp.eq.s32.totalorder %s34, 1
      %p193 = por %p191, %p192
      %p194 = scmp.ne.s32.totalorder %s185, %s186
      %p195 = scmp.eq.s32.totalorder %s34, 0
      %p196 = por %p194, %p195
      %p197 = scmp.ne.s32.totalorder %s185, %s186
      %p198 = scmp.eq.s32.totalorder %s35, 1
      %p199 = por %p197, %p198
      %p201 = scmp.ne.s32.totalorder %s186, %s200
      %p202 = scmp.eq.s32.totalorder %s35, 0
      %p203 = por %p201, %p202
      %s205 = sadd.s32 %s204, 1
      %p208 = scmp.eq.s32.totalorder %s29, 1
      %p209 = scmp.ne.s32.totalorder %s204, %s206
      %p210 = scmp.eq.s32.totalorder %s29, 0
      %p211 = por %p209, %p210
      %p212 = scmp.ne.s32.totalorder %s204, %s206
      %p213 = scmp.eq.s32.totalorder %s34, 1
      %p214 = por %p212, %p213
      %p215 = scmp.ne.s32.totalorder %s206, %s207
      %p216 = scmp.eq.s32.totalorder %s34, 0
      %p217 = por %p215, %p216
      %p218 = scmp.ne.s32.totalorder %s206, %s207
      %p219 = scmp.eq.s32.totalorder %s35, 1
      %p220 = por %p218, %p219
      %p222 = scmp.ne.s32.totalorder %s207, %s221
      %p223 = scmp.eq.s32.totalorder %s35, 0
      %p224 = por %p222, %p223
      %s226 = sadd.s32 %s225, 1
      %p229 = scmp.eq.s32.totalorder %s29, 1
      %p230 = scmp.ne.s32.totalorder %s225, %s227
      %p231 = scmp.eq.s32.totalorder %s29, 0
      %p232 = por %p230, %p231
      %p233 = scmp.ne.s32.totalorder %s225, %s227
      %p234 = scmp.eq.s32.totalorder %s34, 1
      %p235 = por %p233, %p234
      %p236 = scmp.ne.s32.totalorder %s227, %s228
      %p237 = scmp.eq.s32.totalorder %s34, 0
      %p238 = por %p236, %p237
      %p239 = scmp.ne.s32.totalorder %s227, %s228
      %p240 = scmp.eq.s32.totalorder %s35, 1
      %p241 = por %p239, %p240
      %p243 = scmp.ne.s32.totalorder %s228, %s242
      %p244 = scmp.eq.s32.totalorder %s35, 0
      %p245 = por %p243, %p244
      %s247 = sadd.s32 %s246, 1
      %p250 = scmp.eq.s32.totalorder %s29, 1
      %p251 = scmp.ne.s32.totalorder %s246, %s248
      %p252 = scmp.eq.s32.totalorder %s29, 0
      %p253 = por %p251, %p252
      %p254 = scmp.ne.s32.totalorder %s246, %s248
      %p255 = scmp.eq.s32.totalorder %s34, 1
      %p256 = por %p254, %p255
      %p257 = scmp.ne.s32.totalorder %s248, %s249
      %p258 = scmp.eq.s32.totalorder %s34, 0
      %p259 = por %p257, %p258
      %p260 = scmp.ne.s32.totalorder %s248, %s249
      %p261 = scmp.eq.s32.totalorder %s35, 1
      %p262 = por %p260, %p261
      %p264 = scmp.ne.s32.totalorder %s249, %s263
      %p265 = scmp.eq.s32.totalorder %s35, 0
      %p266 = por %p264, %p265
      %s267 = ssub.s32 %s29, %s36
      %p268 = scmp.eq.s32.totalorder %s267, 0
      %s270 = sadd.s32 %s269, 1
      %s271 = scalar_select %p268, %s269, %s270
      %p274 = pneg %p268
      %p275 = scmp.eq.s32.totalorder %s29, 1
      %p276 = por %p274, %p275
      %p277 = scmp.ne.s32.totalorder %s269, %s272
      %p278 = scmp.eq.s32.totalorder %s29, 0
      %p279 = por %p277, %p278
      %p280 = scmp.ne.s32.totalorder %s269, %s272
      %p281 = scmp.eq.s32.totalorder %s34, 1
      %p282 = por %p280, %p281
      %p283 = scmp.ne.s32.totalorder %s272, %s273
      %p284 = scmp.eq.s32.totalorder %s34, 0
      %p285 = por %p283, %p284
      %p286 = scmp.ne.s32.totalorder %s272, %s273
      %p287 = scmp.eq.s32.totalorder %s35, 1
      %p288 = por %p286, %p287
      %p290 = scmp.ne.s32.totalorder %s273, %s289
      %p291 = scmp.eq.s32.totalorder %s35, 0
      %p292 = por %p290, %p291
      %p293 = scmp.le.s32.totalorder 1, %s29
      %p294 = scmp.lt.s32.totalorder %s29, 3
      %p295 = pnand %p293, %p294
      %p296 = pneg %p295
      // Predicated region
      $region9: #{propagation_gcn_layer.1} parent=5 // pred_check
        _
      $region10: #{propagation_gcn_layer.1} parent=5 // pred_check_branch
        %298 = sbr.rel (%p295) target = $region12
      $region11: #{propagation_gcn_layer.1} parent=5 // pred_region
        %s299 = ssub.s32 %s29, 1
        // Predicated region
        $region13: #{propagation_gcn_layer.1} parent=11 // pred_check
          %p300 = pneg %p154
        $region14: #{propagation_gcn_layer.1} parent=11 // pred_check_branch
          %302 = sbr.rel (%p300) target = $region16
        $region15: #{propagation_gcn_layer.1} parent=11 // pred_region
          %s304 = ssub.s32 1024, 1024
          %305 = vsyncadd [#allocation9], %s304
          %s306 = sshll.u32 [#allocation10], 4
          %s307 = int_to_ptr.vmem [resolvable:$true] %s306
          %312 = dma.hbm_to_vmem [thread:$0]  %s4, 1024, %s307, [#allocation9], 64, 64, 4
        $region16: #{propagation_gcn_layer.1} parent=11 // pred_fallthru
          _
        // Predicated region
        $region17: #{propagation_gcn_layer.1} parent=11 // pred_check
          %p313 = pneg %p175
        $region18: #{propagation_gcn_layer.1} parent=11 // pred_check_branch
          %315 = sbr.rel (%p313) target = $region20
        $region19: #{propagation_gcn_layer.1} parent=11 // pred_region
          _
        $region20: #{propagation_gcn_layer.1} parent=11 // pred_fallthru
          _
        // Predicated region
        $region21: #{propagation_gcn_layer.1} parent=11 // pred_check
          %p316 = pneg %p196
        $region22: #{propagation_gcn_layer.1} parent=11 // pred_check_branch
          %318 = sbr.rel (%p316) target = $region24
        $region23: #{propagation_gcn_layer.1} parent=11 // pred_region
          %s320 = ssub.s32 1024, 1024
          %321 = vsyncadd [#allocation12], %s320
          %s322 = sshll.u32 [#allocation11], 4
          %s323 = int_to_ptr.vmem [resolvable:$true] %s322
          %328 = dma.hbm_to_vmem [thread:$0]  %s6, 1024, %s323, [#allocation12], 64, 64, 4
        $region24: #{propagation_gcn_layer.1} parent=11 // pred_fallthru
          _
        // Predicated region
        $region25: #{propagation_gcn_layer.1} parent=11 // pred_check
          %p329 = pneg %p217
        $region26: #{propagation_gcn_layer.1} parent=11 // pred_check_branch
          %331 = sbr.rel (%p329) target = $region28
        $region27: #{propagation_gcn_layer.1} parent=11 // pred_region
          _
        $region28: #{propagation_gcn_layer.1} parent=11 // pred_fallthru
          _
        // Predicated region
        $region29: #{propagation_gcn_layer.1} parent=11 // pred_check
          %p332 = pneg %p238
        $region30: #{propagation_gcn_layer.1} parent=11 // pred_check_branch
          %334 = sbr.rel (%p332) target = $region32
        $region31: #{propagation_gcn_layer.1} parent=11 // pred_region
          %s336 = ssub.s32 1024, 1024
          %337 = vsyncadd [#allocation12], %s336
          %s338 = sshll.u32 [#allocation13], 4
          %s339 = int_to_ptr.vmem [resolvable:$true] %s338
          %344 = dma.hbm_to_vmem [thread:$0]  %s8, 1024, %s339, [#allocation12], 64, 64, 4
        $region32: #{propagation_gcn_layer.1} parent=11 // pred_fallthru
          _
        // Predicated region
        $region33: #{propagation_gcn_layer.1} parent=11 // pred_check
          %p345 = pneg %p259
        $region34: #{propagation_gcn_layer.1} parent=11 // pred_check_branch
          %347 = sbr.rel (%p345) target = $region36
        $region35: #{propagation_gcn_layer.1} parent=11 // pred_region
          _
        $region36: #{propagation_gcn_layer.1} parent=11 // pred_fallthru
          _
      $region12: #{propagation_gcn_layer.1} parent=5 // pred_fallthru
        _
      %p348 = scmp.lt.s32.totalorder %s29, 2
      // Predicated region
      $region37: #{propagation_gcn_layer.1} parent=5 // pred_check
        %p349 = pneg %p348
      $region38: #{propagation_gcn_layer.1} parent=5 // pred_check_branch
        %351 = sbr.rel (%p349) target = $region40
      $region39: #{propagation_gcn_layer.1} parent=5 // pred_region
        // Predicated region
        $region41: #{propagation_gcn_layer.1} parent=39 // pred_check
          %p352 = pneg %p49
        $region42: #{propagation_gcn_layer.1} parent=39 // pred_check_branch
          %354 = sbr.rel (%p352) target = $region44
        $region43: #{propagation_gcn_layer.1} parent=39 // pred_region
          %s355 = sand.u32 %s39, 1
          %s356 = scalar_lea.sflag [#allocation3], %s355
          %s357 = sand.u32 %s39, 1
          %s358 = smul.addr %s357, 64
          %s359 = scalar_lea.vmem [#allocation2], %s358
          %s361 = ssub.s32 1024, 1024
          %362 = vsyncadd %s356, %s361
          %s363 = smul.addr %s29, 16
          %s364 = smul.addr %s363, 64
          %s365 = scalar_lea.hbm %s0, %s364
          %s366 = sshll.u32 %s359, 4
          %s367 = int_to_ptr.vmem [resolvable:$true] %s366
          %372 = dma.hbm_to_vmem [thread:$0]  %s365, 1024, %s367, %s356, 64, 64, 4
        $region44: #{propagation_gcn_layer.1} parent=39 // pred_fallthru
          _
        // Predicated region
        $region45: #{propagation_gcn_layer.1} parent=39 // pred_check
          %p373 = pneg %p75
        $region46: #{propagation_gcn_layer.1} parent=39 // pred_check_branch
          %375 = sbr.rel (%p373) target = $region48
        $region47: #{propagation_gcn_layer.1} parent=39 // pred_region
          %s376 = sand.u32 %s29, 1
          %s377 = scalar_lea.sflag [#allocation6], %s376
          %s378 = sand.u32 %s65, 1
          %s379 = smul.addr %s378, 64
          %s380 = scalar_lea.vmem [#allocation5], %s379
          %s382 = ssub.s32 1024, 1024
          %383 = vsyncadd %s377, %s382
          %s384 = smul.addr %s29, 16
          %s385 = smul.addr %s384, 64
          %s386 = scalar_lea.hbm %s1, %s385
          %s387 = sshll.u32 %s380, 4
          %s388 = int_to_ptr.vmem [resolvable:$true] %s387
          %393 = dma.hbm_to_vmem [thread:$0]  %s386, 1024, %s388, %s377, 64, 64, 4
        $region48: #{propagation_gcn_layer.1} parent=39 // pred_fallthru
          _
        // Predicated region
        $region49: #{propagation_gcn_layer.1} parent=39 // pred_check
          %p394 = pneg %p101
        $region50: #{propagation_gcn_layer.1} parent=39 // pred_check_branch
          %396 = sbr.rel (%p394) target = $region52
        $region51: #{propagation_gcn_layer.1} parent=39 // pred_region
          %s397 = sand.u32 %s29, 1
          %s398 = scalar_lea.sflag [#allocation6], %s397
          %s399 = sand.u32 %s91, 1
          %s400 = smul.addr %s399, 8
          %s401 = scalar_lea.vmem [#allocation7], %s400
          %s403 = ssub.s32 128, 128
          %404 = vsyncadd %s398, %s403
          %s405 = smul.addr %s29, 128
          %s406 = scalar_lea.hbm %s2, %s405
          %s408 = sshll.u32 %s401, 4
          %s409 = int_to_ptr.vmem [resolvable:$true] %s408
          %411 = dma.hbm_to_vmem [thread:$0]  %s406, 128, %s409, %s398
        $region52: #{propagation_gcn_layer.1} parent=39 // pred_fallthru
          _
        // Predicated region
        $region53: #{propagation_gcn_layer.1} parent=39 // pred_check
          %p412 = pneg %p127
        $region54: #{propagation_gcn_layer.1} parent=39 // pred_check_branch
          %414 = sbr.rel (%p412) target = $region56
        $region55: #{propagation_gcn_layer.1} parent=39 // pred_region
          %s415 = sand.u32 %s29, 1
          %s416 = scalar_lea.sflag [#allocation9], %s415
          %s417 = sand.u32 %s117, 1
          %s418 = smul.addr %s417, 8
          %s419 = scalar_lea.vmem [#allocation8], %s418
          %s421 = ssub.s32 128, 128
          %422 = vsyncadd %s416, %s421
          %s423 = smul.addr %s29, 128
          %s424 = scalar_lea.hbm %s3, %s423
          %s426 = sshll.u32 %s419, 4
          %s427 = int_to_ptr.vmem [resolvable:$true] %s426
          %429 = dma.hbm_to_vmem [thread:$0]  %s424, 128, %s427, %s416
        $region56: #{propagation_gcn_layer.1} parent=39 // pred_fallthru
          _
      $region40: #{propagation_gcn_layer.1} parent=5 // pred_fallthru
        _
      %p430 = scmp.le.s32.totalorder 1, %s29
      %p431 = scmp.lt.s32.totalorder %s29, 3
      %p432 = pnand %p430, %p431
      %p433 = pneg %p432
      // Predicated region
      $region57: #{propagation_gcn_layer.1} parent=5 // pred_check
        _
      $region58: #{propagation_gcn_layer.1} parent=5 // pred_check_branch
        %435 = sbr.rel (%p432) target = $region60
      $region59: #{propagation_gcn_layer.1} parent=5 // pred_region
        %s436 = ssub.s32 %s29, 1
        %s437 = sand.u32 %s42, 1
        %s438 = scalar_lea.sflag [#allocation3], %s437
        %s439 = sand.u32 %s42, 1
        %s440 = smul.addr %s439, 64
        %s441 = scalar_lea.vmem [#allocation2], %s440
        // Predicated region
        $region61: #{propagation_gcn_layer.1} parent=59 // pred_check
          %p442 = pneg %p55
        $region62: #{propagation_gcn_layer.1} parent=59 // pred_check_branch
          %444 = sbr.rel (%p442) target = $region64
        $region63: #{propagation_gcn_layer.1} parent=59 // pred_region
          %445 = dma.done %s438, 1024
        $region64: #{propagation_gcn_layer.1} parent=59 // pred_fallthru
          _
        %s446 = sand.u32 %s34, 1
        %s447 = scalar_lea.sflag [#allocation6], %s446
        %s448 = sand.u32 %s68, 1
        %s449 = smul.addr %s448, 64
        %s450 = scalar_lea.vmem [#allocation5], %s449
        // Predicated region
        $region65: #{propagation_gcn_layer.1} parent=59 // pred_check
          %p451 = pneg %p81
        $region66: #{propagation_gcn_layer.1} parent=59 // pred_check_branch
          %453 = sbr.rel (%p451) target = $region68
        $region67: #{propagation_gcn_layer.1} parent=59 // pred_region
          %454 = dma.done %s447, 1024
        $region68: #{propagation_gcn_layer.1} parent=59 // pred_fallthru
          _
        %s455 = sand.u32 %s34, 1
        %s456 = scalar_lea.sflag [#allocation6], %s455
        %s457 = sand.u32 %s94, 1
        %s458 = smul.addr %s457, 8
        %s459 = scalar_lea.vmem [#allocation7], %s458
        // Predicated region
        $region69: #{propagation_gcn_layer.1} parent=59 // pred_check
          %p460 = pneg %p107
        $region70: #{propagation_gcn_layer.1} parent=59 // pred_check_branch
          %462 = sbr.rel (%p460) target = $region72
        $region71: #{propagation_gcn_layer.1} parent=59 // pred_region
          %463 = dma.done %s456, 128
        $region72: #{propagation_gcn_layer.1} parent=59 // pred_fallthru
          _
        %s464 = sand.u32 %s34, 1
        %s465 = scalar_lea.sflag [#allocation9], %s464
        %s466 = sand.u32 %s120, 1
        %s467 = smul.addr %s466, 8
        %s468 = scalar_lea.vmem [#allocation8], %s467
        // Predicated region
        $region73: #{propagation_gcn_layer.1} parent=59 // pred_check
          %p469 = pneg %p133
        $region74: #{propagation_gcn_layer.1} parent=59 // pred_check_branch
          %471 = sbr.rel (%p469) target = $region76
        $region75: #{propagation_gcn_layer.1} parent=59 // pred_region
          %472 = dma.done %s465, 128
        $region76: #{propagation_gcn_layer.1} parent=59 // pred_fallthru
          _
        // Predicated region
        $region77: #{propagation_gcn_layer.1} parent=59 // pred_check
          %p473 = pneg %p154
        $region78: #{propagation_gcn_layer.1} parent=59 // pred_check_branch
          %475 = sbr.rel (%p473) target = $region80
        $region79: #{propagation_gcn_layer.1} parent=59 // pred_region
          %476 = dma.done [#allocation9], 1024
        $region80: #{propagation_gcn_layer.1} parent=59 // pred_fallthru
          _
        // Predicated region
        $region81: #{propagation_gcn_layer.1} parent=59 // pred_check
          %p477 = pneg %p196
        $region82: #{propagation_gcn_layer.1} parent=59 // pred_check_branch
          %479 = sbr.rel (%p477) target = $region84
        $region83: #{propagation_gcn_layer.1} parent=59 // pred_region
          %480 = dma.done [#allocation12], 1024
        $region84: #{propagation_gcn_layer.1} parent=59 // pred_fallthru
          _
        // Predicated region
        $region85: #{propagation_gcn_layer.1} parent=59 // pred_check
          %p481 = pneg %p238
        $region86: #{propagation_gcn_layer.1} parent=59 // pred_check_branch
          %483 = sbr.rel (%p481) target = $region88
        $region87: #{propagation_gcn_layer.1} parent=59 // pred_region
          %484 = dma.done [#allocation12], 1024
        $region88: #{propagation_gcn_layer.1} parent=59 // pred_fallthru
          _
        %s485 = sand.u32 %s42, 1
        %s486 = scalar_lea.sflag [#allocation3], %s485
        %s487 = sand.u32 %s42, 1
        %s488 = smul.addr %s487, 64
        %s489 = scalar_lea.vmem [#allocation2], %s488
        %p490 = pneg %p55
        %p491 = pneg %p52
        %s492 = sand.u32 %s34, 1
        %s493 = scalar_lea.sflag [#allocation6], %s492
        %s494 = sand.u32 %s68, 1
        %s495 = smul.addr %s494, 64
        %s496 = scalar_lea.vmem [#allocation5], %s495
        %p497 = pneg %p81
        %p498 = pneg %p78
        %s499 = sand.u32 %s34, 1
        %s500 = scalar_lea.sflag [#allocation6], %s499
        %s501 = sand.u32 %s94, 1
        %s502 = smul.addr %s501, 8
        %s503 = scalar_lea.vmem [#allocation7], %s502
        %p504 = pneg %p107
        %p505 = pneg %p104
        %s506 = sand.u32 %s34, 1
        %s507 = scalar_lea.sflag [#allocation9], %s506
        %s508 = sand.u32 %s120, 1
        %s509 = smul.addr %s508, 8
        %s510 = scalar_lea.vmem [#allocation8], %s509
        %p511 = pneg %p133
        %p512 = pneg %p130
        %p513 = pneg %p154
        %p514 = pneg %p151
        %p515 = pneg %p175
        %p516 = pneg %p172
        %p517 = pneg %p196
        %p518 = pneg %p193
        %p519 = pneg %p217
        %p520 = pneg %p214
        %p521 = pneg %p238
        %p522 = pneg %p235
        %p523 = pneg %p259
        %p524 = pneg %p256
        %p525 = pneg %p285
        %p526 = pneg %p282
        %s527 = sand.u32 %s272, 1
        %s528 = scalar_lea.sflag [#allocation4], %s527
        %s529 = sand.u32 %s272, 1
        %s530 = smul.addr %s529, 128
        %s531 = scalar_lea.vmem [#allocation14], %s530
        %v533 = vld [vmem:[%s441] sm:$0xf]
        %v534 = vld [vmem:[%s441 + $0x4] sm:$0xf]
        %v535 = vld [vmem:[%s441 + $0x8] sm:$0xf]
        %v536 = vld [vmem:[%s441 + $0xc] sm:$0xf]
        %v537 = vld [vmem:[%s441 + $0x10] sm:$0xf]
        %v538 = vld [vmem:[%s441 + $0x14] sm:$0xf]
        %v539 = vld [vmem:[%s441 + $0x18] sm:$0xf]
        %v540 = vld [vmem:[%s441 + $0x1c] sm:$0xf]
        %v541 = vld [vmem:[%s441 + $0x20] sm:$0xf]
        %v542 = vld [vmem:[%s441 + $0x24] sm:$0xf]
        %v543 = vld [vmem:[%s441 + $0x28] sm:$0xf]
        %v544 = vld [vmem:[%s441 + $0x2c] sm:$0xf]
        %v545 = vld [vmem:[%s441 + $0x30] sm:$0xf]
        %v546 = vld [vmem:[%s441 + $0x34] sm:$0xf]
        %v547 = vld [vmem:[%s441 + $0x38] sm:$0xf]
        %v548 = vld [vmem:[%s441 + $0x3c] sm:$0xf]
        %v549 = vld [vmem:[%s450] sm:$0xf]
        %v550 = vld [vmem:[%s450 + $0x4] sm:$0xf]
        %v551 = vld [vmem:[%s450 + $0x8] sm:$0xf]
        %v552 = vld [vmem:[%s450 + $0xc] sm:$0xf]
        %v553 = vld [vmem:[%s450 + $0x10] sm:$0xf]
        %v554 = vld [vmem:[%s450 + $0x14] sm:$0xf]
        %v555 = vld [vmem:[%s450 + $0x18] sm:$0xf]
        %v556 = vld [vmem:[%s450 + $0x1c] sm:$0xf]
        %v557 = vld [vmem:[%s450 + $0x20] sm:$0xf]
        %v558 = vld [vmem:[%s450 + $0x24] sm:$0xf]
        %v559 = vld [vmem:[%s450 + $0x28] sm:$0xf]
        %v560 = vld [vmem:[%s450 + $0x2c] sm:$0xf]
        %v561 = vld [vmem:[%s450 + $0x30] sm:$0xf]
        %v562 = vld [vmem:[%s450 + $0x34] sm:$0xf]
        %v563 = vld [vmem:[%s450 + $0x38] sm:$0xf]
        %v564 = vld [vmem:[%s450 + $0x3c] sm:$0xf]
        %v565 = vld [vmem:[#allocation10] sm:$0xf]
        %v566 = vld [vmem:[#allocation10 + $0x4] sm:$0xf]
        %v567 = vld [vmem:[#allocation10 + $0x8] sm:$0xf]
        %v568 = vld [vmem:[#allocation10 + $0xc] sm:$0xf]
        %v569 = vld [vmem:[#allocation10 + $0x10] sm:$0xf]
        %v570 = vld [vmem:[#allocation10 + $0x14] sm:$0xf]
        %v571 = vld [vmem:[#allocation10 + $0x18] sm:$0xf]
        %v572 = vld [vmem:[#allocation10 + $0x1c] sm:$0xf]
        %v573 = vld [vmem:[#allocation10 + $0x20] sm:$0xf]
        %v574 = vld [vmem:[#allocation10 + $0x24] sm:$0xf]
        %v575 = vld [vmem:[#allocation10 + $0x28] sm:$0xf]
        %v576 = vld [vmem:[#allocation10 + $0x2c] sm:$0xf]
        %v577 = vld [vmem:[#allocation10 + $0x30] sm:$0xf]
        %v578 = vld [vmem:[#allocation10 + $0x34] sm:$0xf]
        %v579 = vld [vmem:[#allocation10 + $0x38] sm:$0xf]
        %v580 = vld [vmem:[#allocation10 + $0x3c] sm:$0xf]
        %v597 = vunpack.c.l.b16 %v533
        %v598 = vunpack.c.l.b16 %v534
        %v599 = vunpack.c.l.b16 %v535
        %v600 = vunpack.c.l.b16 %v536
        %v601 = vunpack.c.l.b16 %v537
        %v602 = vunpack.c.l.b16 %v538
        %v603 = vunpack.c.l.b16 %v539
        %v604 = vunpack.c.l.b16 %v540
        %v605 = vunpack.c.l.b16 %v541
        %v606 = vunpack.c.l.b16 %v542
        %v607 = vunpack.c.l.b16 %v543
        %v608 = vunpack.c.l.b16 %v544
        %v609 = vunpack.c.l.b16 %v545
        %v610 = vunpack.c.l.b16 %v546
        %v611 = vunpack.c.l.b16 %v547
        %v612 = vunpack.c.l.b16 %v548
        %v613 = vpack.c.b16 %v598, %v597
        %v614 = vpack.c.b16 %v600, %v599
        %v615 = vpack.c.b16 %v602, %v601
        %v616 = vpack.c.b16 %v604, %v603
        %v617 = vpack.c.b16 %v606, %v605
        %v618 = vpack.c.b16 %v608, %v607
        %v619 = vpack.c.b16 %v610, %v609
        %v620 = vpack.c.b16 %v612, %v611
        %v645 = vunpack.c.l.b16 %v565
        %v646 = vunpack.c.l.b16 %v566
        %v647 = vunpack.c.l.b16 %v567
        %v648 = vunpack.c.l.b16 %v568
        %v649 = vunpack.c.l.b16 %v569
        %v650 = vunpack.c.l.b16 %v570
        %v651 = vunpack.c.l.b16 %v571
        %v652 = vunpack.c.l.b16 %v572
        %v653 = vunpack.c.l.b16 %v573
        %v654 = vunpack.c.l.b16 %v574
        %v655 = vunpack.c.l.b16 %v575
        %v656 = vunpack.c.l.b16 %v576
        %v657 = vunpack.c.l.b16 %v577
        %v658 = vunpack.c.l.b16 %v578
        %v659 = vunpack.c.l.b16 %v579
        %v660 = vunpack.c.l.b16 %v580
        %v661 = vpack.c.b16 %v646, %v645
        %v662 = vpack.c.b16 %v648, %v647
        %v663 = vpack.c.b16 %v650, %v649
        %v664 = vpack.c.b16 %v652, %v651
        %v665 = vpack.c.b16 %v654, %v653
        %v666 = vpack.c.b16 %v656, %v655
        %v667 = vpack.c.b16 %v658, %v657
        %v668 = vpack.c.b16 %v660, %v659
        %677 = vmatprep.subr.bf16.mxu0 0
        %678 = vmatpush1.bf16.msra.mxu0 %v661
        %679 = vmatprep.subr.bf16.mxu0 0
        %680 = vmatpush1.bf16.msra.mxu0 %v662
        %681 = vmatprep.subr.bf16.mxu0 0
        %682 = vmatpush1.bf16.msra.mxu0 %v663
        %683 = vmatprep.subr.bf16.mxu0 0
        %684 = vmatpush1.bf16.msra.mxu0 %v664
        %685 = vmatprep.subr.bf16.mxu0 0
        %686 = vmatpush1.bf16.msra.mxu0 %v665
        %687 = vmatprep.subr.bf16.mxu0 0
        %688 = vmatpush1.bf16.msra.mxu0 %v666
        %689 = vmatprep.subr.bf16.mxu0 0
        %690 = vmatpush1.bf16.msra.mxu0 %v667
        %691 = vmatprep.subr.bf16.mxu0 0
        %692 = vmatpush1.bf16.msra.mxu0 %v668
        %693 = vmatprep.subr.bf16.mxu0 0
        %694 = vmatpush1.bf16.msra.mxu0 0
        %695 = vmatprep.subr.bf16.mxu0 0
        %696 = vmatpush1.bf16.msra.mxu0 0
        %697 = vmatprep.subr.bf16.mxu0 0
        %698 = vmatpush1.bf16.msra.mxu0 0
        %699 = vmatprep.subr.bf16.mxu0 0
        %700 = vmatpush1.bf16.msra.mxu0 0
        %701 = vmatprep.subr.bf16.mxu0 0
        %702 = vmatpush1.bf16.msra.mxu0 0
        %703 = vmatprep.subr.bf16.mxu0 0
        %704 = vmatpush1.bf16.msra.mxu0 0
        %705 = vmatprep.subr.bf16.mxu0 0
        %706 = vmatpush1.bf16.msra.mxu0 0
        %707 = vmatprep.subr.bf16.mxu0 0
        %708 = vmatpush1.bf16.msra.mxu0 0
        %709 = vmatprep.mubr.bf16.mxu0 0
        %710 = vmatmul.mubr.bf16.gmra.mrb[0].mxu0 %v613
        %v711 = vpop.f32.mrb[0].mxu0
        %v712 = vadd.f32 0.0, %v711
        %v713 = vpop.f32.mrb[0].mxu0
        %v714 = vpop.f32.mrb[0].mxu0
        %v715 = vadd.f32 0.0, %v714
        %v716 = vpop.f32.mrb[0].mxu0
        %717 = vmatprep.mubr.bf16.mxu0 0
        %718 = vmatmul.mubr.bf16.gmra.mrb[0].mxu0 %v614
        %v719 = vpop.f32.mrb[0].mxu0
        %v720 = vadd.f32 0.0, %v719
        %v721 = vpop.f32.mrb[0].mxu0
        %v722 = vpop.f32.mrb[0].mxu0
        %v723 = vadd.f32 0.0, %v722
        %v724 = vpop.f32.mrb[0].mxu0
        %725 = vmatprep.mubr.bf16.mxu0 0
        %726 = vmatmul.mubr.bf16.gmra.mrb[0].mxu0 %v615
        %v727 = vpop.f32.mrb[0].mxu0
        %v728 = vadd.f32 0.0, %v727
        %v729 = vpop.f32.mrb[0].mxu0
        %v730 = vpop.f32.mrb[0].mxu0
        %v731 = vadd.f32 0.0, %v730
        %v732 = vpop.f32.mrb[0].mxu0
        %733 = vmatprep.mubr.bf16.mxu0 0
        %734 = vmatmul.mubr.bf16.gmra.mrb[0].mxu0 %v616
        %v735 = vpop.f32.mrb[0].mxu0
        %v736 = vadd.f32 0.0, %v735
        %v737 = vpop.f32.mrb[0].mxu0
        %v738 = vpop.f32.mrb[0].mxu0
        %v739 = vadd.f32 0.0, %v738
        %v740 = vpop.f32.mrb[0].mxu0
        %741 = vmatprep.mubr.bf16.mxu0 0
        %742 = vmatmul.mubr.bf16.gmra.mrb[0].mxu0 %v617
        %v743 = vpop.f32.mrb[0].mxu0
        %v744 = vadd.f32 0.0, %v743
        %v745 = vpop.f32.mrb[0].mxu0
        %v746 = vpop.f32.mrb[0].mxu0
        %v747 = vadd.f32 0.0, %v746
        %v748 = vpop.f32.mrb[0].mxu0
        %749 = vmatprep.mubr.bf16.mxu0 0
        %750 = vmatmul.mubr.bf16.gmra.mrb[0].mxu0 %v618
        %v751 = vpop.f32.mrb[0].mxu0
        %v752 = vadd.f32 0.0, %v751
        %v753 = vpop.f32.mrb[0].mxu0
        %v754 = vpop.f32.mrb[0].mxu0
        %v755 = vadd.f32 0.0, %v754
        %v756 = vpop.f32.mrb[0].mxu0
        %757 = vmatprep.mubr.bf16.mxu0 0
        %758 = vmatmul.mubr.bf16.gmra.mrb[0].mxu0 %v619
        %v759 = vpop.f32.mrb[0].mxu0
        %v760 = vadd.f32 0.0, %v759
        %v761 = vpop.f32.mrb[0].mxu0
        %v762 = vpop.f32.mrb[0].mxu0
        %v763 = vadd.f32 0.0, %v762
        %v764 = vpop.f32.mrb[0].mxu0
        %765 = vmatprep.mubr.bf16.mxu0 0
        %766 = vmatmul.mubr.bf16.gmra.mrb[0].mxu0 %v620
        %v767 = vpop.f32.mrb[0].mxu0
        %v768 = vadd.f32 0.0, %v767
        %v769 = vpop.f32.mrb[0].mxu0
        %v770 = vpop.f32.mrb[0].mxu0
        %v771 = vadd.f32 0.0, %v770
        %v772 = vpop.f32.mrb[0].mxu0
        %773 = vdwg.mxu0
        %v774 = vpack.c.bf16 %v715, %v712
        %v775 = vpack.c.bf16 %v723, %v720
        %v776 = vpack.c.bf16 %v731, %v728
        %v777 = vpack.c.bf16 %v739, %v736
        %v778 = vpack.c.bf16 %v747, %v744
        %v779 = vpack.c.bf16 %v755, %v752
        %v780 = vpack.c.bf16 %v763, %v760
        %v781 = vpack.c.bf16 %v771, %v768
        %v782 = vld [vmem:[%s5] sm:$0x1]
        %v784 = vlaneseq
        %v785 = vshrl.u32 %v784, 7
        %v786 = vsub.s32 0, %v785
        %v787 = vrot.slane %v782, %v786
        %v805 = vunpack.c.l.b16 %v549
        %v806 = vunpack.c.l.b16 %v550
        %v807 = vunpack.c.l.b16 %v551
        %v808 = vunpack.c.l.b16 %v552
        %v809 = vunpack.c.l.b16 %v553
        %v810 = vunpack.c.l.b16 %v554
        %v811 = vunpack.c.l.b16 %v555
        %v812 = vunpack.c.l.b16 %v556
        %v813 = vunpack.c.l.b16 %v557
        %v814 = vunpack.c.l.b16 %v558
        %v815 = vunpack.c.l.b16 %v559
        %v816 = vunpack.c.l.b16 %v560
        %v817 = vunpack.c.l.b16 %v561
        %v818 = vunpack.c.l.b16 %v562
        %v819 = vunpack.c.l.b16 %v563
        %v820 = vunpack.c.l.b16 %v564
        %v821 = vpack.c.b16 %v806, %v805
        %v822 = vpack.c.b16 %v808, %v807
        %v823 = vpack.c.b16 %v810, %v809
        %v824 = vpack.c.b16 %v812, %v811
        %v825 = vpack.c.b16 %v814, %v813
        %v826 = vpack.c.b16 %v816, %v815
        %v827 = vpack.c.b16 %v818, %v817
        %v828 = vpack.c.b16 %v820, %v819
        %837 = vmatprep.subr.bf16.mxu0 0
        %838 = vmatpush1.bf16.msra.mxu0 %v774
        %839 = vmatprep.subr.bf16.mxu0 0
        %840 = vmatpush1.bf16.msra.mxu0 %v775
        %841 = vmatprep.subr.bf16.mxu0 0
        %842 = vmatpush1.bf16.msra.mxu0 %v776
        %843 = vmatprep.subr.bf16.mxu0 0
        %844 = vmatpush1.bf16.msra.mxu0 %v777
        %845 = vmatprep.subr.bf16.mxu0 0
        %846 = vmatpush1.bf16.msra.mxu0 %v778
        %847 = vmatprep.subr.bf16.mxu0 0
        %848 = vmatpush1.bf16.msra.mxu0 %v779
        %849 = vmatprep.subr.bf16.mxu0 0
        %850 = vmatpush1.bf16.msra.mxu0 %v780
        %851 = vmatprep.subr.bf16.mxu0 0
        %852 = vmatpush1.bf16.msra.mxu0 %v781
        %853 = vmatprep.subr.bf16.mxu0 0
        %854 = vmatpush1.bf16.msra.mxu0 0
        %855 = vmatprep.subr.bf16.mxu0 0
        %856 = vmatpush1.bf16.msra.mxu0 0
        %857 = vmatprep.subr.bf16.mxu0 0
        %858 = vmatpush1.bf16.msra.mxu0 0
        %859 = vmatprep.subr.bf16.mxu0 0
        %860 = vmatpush1.bf16.msra.mxu0 0
        %861 = vmatprep.subr.bf16.mxu0 0
        %862 = vmatpush1.bf16.msra.mxu0 0
        %863 = vmatprep.subr.bf16.mxu0 0
        %864 = vmatpush1.bf16.msra.mxu0 0
        %865 = vmatprep.subr.bf16.mxu0 0
        %866 = vmatpush1.bf16.msra.mxu0 0
        %867 = vmatprep.subr.bf16.mxu0 0
        %868 = vmatpush1.bf16.msra.mxu0 0
        %869 = vmatprep.mubr.bf16.mxu0 0
        %870 = vmatmul.mubr.bf16.gmra.mrb[0].mxu0 %v821
        %v871 = vpop.f32.mrb[0].mxu0
        %v872 = vadd.f32 %v787, %v871
        %v873 = vpop.f32.mrb[0].mxu0
        %v874 = vpop.f32.mrb[0].mxu0
        %v875 = vadd.f32 %v787, %v874
        %v876 = vpop.f32.mrb[0].mxu0
        %877 = vmatprep.mubr.bf16.mxu0 0
        %878 = vmatmul.mubr.bf16.gmra.mrb[0].mxu0 %v822
        %v879 = vpop.f32.mrb[0].mxu0
        %v880 = vadd.f32 %v787, %v879
        %v881 = vpop.f32.mrb[0].mxu0
        %v882 = vpop.f32.mrb[0].mxu0
        %v883 = vadd.f32 %v787, %v882
        %v884 = vpop.f32.mrb[0].mxu0
        %885 = vmatprep.mubr.bf16.mxu0 0
        %886 = vmatmul.mubr.bf16.gmra.mrb[0].mxu0 %v823
        %v887 = vpop.f32.mrb[0].mxu0
        %v888 = vadd.f32 %v787, %v887
        %v889 = vpop.f32.mrb[0].mxu0
        %v890 = vpop.f32.mrb[0].mxu0
        %v891 = vadd.f32 %v787, %v890
        %v892 = vpop.f32.mrb[0].mxu0
        %893 = vmatprep.mubr.bf16.mxu0 0
        %894 = vmatmul.mubr.bf16.gmra.mrb[0].mxu0 %v824
        %v895 = vpop.f32.mrb[0].mxu0
        %v896 = vadd.f32 %v787, %v895
        %v897 = vpop.f32.mrb[0].mxu0
        %v898 = vpop.f32.mrb[0].mxu0
        %v899 = vadd.f32 %v787, %v898
        %v900 = vpop.f32.mrb[0].mxu0
        %901 = vmatprep.mubr.bf16.mxu0 0
        %902 = vmatmul.mubr.bf16.gmra.mrb[0].mxu0 %v825
        %v903 = vpop.f32.mrb[0].mxu0
        %v904 = vadd.f32 %v787, %v903
        %v905 = vpop.f32.mrb[0].mxu0
        %v906 = vpop.f32.mrb[0].mxu0
        %v907 = vadd.f32 %v787, %v906
        %v908 = vpop.f32.mrb[0].mxu0
        %909 = vmatprep.mubr.bf16.mxu0 0
        %910 = vmatmul.mubr.bf16.gmra.mrb[0].mxu0 %v826
        %v911 = vpop.f32.mrb[0].mxu0
        %v912 = vadd.f32 %v787, %v911
        %v913 = vpop.f32.mrb[0].mxu0
        %v914 = vpop.f32.mrb[0].mxu0
        %v915 = vadd.f32 %v787, %v914
        %v916 = vpop.f32.mrb[0].mxu0
        %917 = vmatprep.mubr.bf16.mxu0 0
        %918 = vmatmul.mubr.bf16.gmra.mrb[0].mxu0 %v827
        %v919 = vpop.f32.mrb[0].mxu0
        %v920 = vadd.f32 %v787, %v919
        %v921 = vpop.f32.mrb[0].mxu0
        %v922 = vpop.f32.mrb[0].mxu0
        %v923 = vadd.f32 %v787, %v922
        %v924 = vpop.f32.mrb[0].mxu0
        %925 = vmatprep.mubr.bf16.mxu0 0
        %926 = vmatmul.mubr.bf16.gmra.mrb[0].mxu0 %v828
        %v927 = vpop.f32.mrb[0].mxu0
        %v928 = vadd.f32 %v787, %v927
        %v929 = vpop.f32.mrb[0].mxu0
        %v930 = vpop.f32.mrb[0].mxu0
        %v931 = vadd.f32 %v787, %v930
        %v932 = vpop.f32.mrb[0].mxu0
        %933 = vdwg.mxu0
        %v934 = vmul.f32 %v872, 0.01
        %v935 = vmul.f32 %v875, 0.01
        %v936 = vmul.f32 %v880, 0.01
        %v937 = vmul.f32 %v883, 0.01
        %v938 = vmul.f32 %v888, 0.01
        %v939 = vmul.f32 %v891, 0.01
        %v940 = vmul.f32 %v896, 0.01
        %v941 = vmul.f32 %v899, 0.01
        %v942 = vmul.f32 %v904, 0.01
        %v943 = vmul.f32 %v907, 0.01
        %v944 = vmul.f32 %v912, 0.01
        %v945 = vmul.f32 %v915, 0.01
        %v946 = vmul.f32 %v920, 0.01
        %v947 = vmul.f32 %v923, 0.01
        %v948 = vmul.f32 %v928, 0.01
        %v949 = vmul.f32 %v931, 0.01
        %v950 = vmax.f32 %v872, %v934
        %v951 = vmax.f32 %v875, %v935
        %v952 = vmax.f32 %v880, %v936
        %v953 = vmax.f32 %v883, %v937
        %v954 = vmax.f32 %v888, %v938
        %v955 = vmax.f32 %v891, %v939
        %v956 = vmax.f32 %v896, %v940
        %v957 = vmax.f32 %v899, %v941
        %v958 = vmax.f32 %v904, %v942
        %v959 = vmax.f32 %v907, %v943
        %v960 = vmax.f32 %v912, %v944
        %v961 = vmax.f32 %v915, %v945
        %v962 = vmax.f32 %v920, %v946
        %v963 = vmax.f32 %v923, %v947
        %v964 = vmax.f32 %v928, %v948
        %v965 = vmax.f32 %v931, %v949
        %v966 = vpack.c.bf16 %v951, %v950
        %v967 = vpack.c.bf16 %v953, %v952
        %v968 = vpack.c.bf16 %v955, %v954
        %v969 = vpack.c.bf16 %v957, %v956
        %v970 = vpack.c.bf16 %v959, %v958
        %v971 = vpack.c.bf16 %v961, %v960
        %v972 = vpack.c.bf16 %v963, %v962
        %v973 = vpack.c.bf16 %v965, %v964
        %v974 = vld [vmem:[#allocation11] sm:$0xf]
        %v975 = vld [vmem:[#allocation11 + $0x4] sm:$0xf]
        %v976 = vld [vmem:[#allocation11 + $0x8] sm:$0xf]
        %v977 = vld [vmem:[#allocation11 + $0xc] sm:$0xf]
        %v978 = vld [vmem:[#allocation11 + $0x10] sm:$0xf]
        %v979 = vld [vmem:[#allocation11 + $0x14] sm:$0xf]
        %v980 = vld [vmem:[#allocation11 + $0x18] sm:$0xf]
        %v981 = vld [vmem:[#allocation11 + $0x1c] sm:$0xf]
        %v982 = vld [vmem:[#allocation11 + $0x20] sm:$0xf]
        %v983 = vld [vmem:[#allocation11 + $0x24] sm:$0xf]
        %v984 = vld [vmem:[#allocation11 + $0x28] sm:$0xf]
        %v985 = vld [vmem:[#allocation11 + $0x2c] sm:$0xf]
        %v986 = vld [vmem:[#allocation11 + $0x30] sm:$0xf]
        %v987 = vld [vmem:[#allocation11 + $0x34] sm:$0xf]
        %v988 = vld [vmem:[#allocation11 + $0x38] sm:$0xf]
        %v989 = vld [vmem:[#allocation11 + $0x3c] sm:$0xf]
        %v1006 = vunpack.c.l.b16 %v974
        %v1007 = vunpack.c.l.b16 %v975
        %v1008 = vunpack.c.l.b16 %v976
        %v1009 = vunpack.c.l.b16 %v977
        %v1010 = vunpack.c.l.b16 %v978
        %v1011 = vunpack.c.l.b16 %v979
        %v1012 = vunpack.c.l.b16 %v980
        %v1013 = vunpack.c.l.b16 %v981
        %v1014 = vunpack.c.l.b16 %v982
        %v1015 = vunpack.c.l.b16 %v983
        %v1016 = vunpack.c.l.b16 %v984
        %v1017 = vunpack.c.l.b16 %v985
        %v1018 = vunpack.c.l.b16 %v986
        %v1019 = vunpack.c.l.b16 %v987
        %v1020 = vunpack.c.l.b16 %v988
        %v1021 = vunpack.c.l.b16 %v989
        %v1022 = vpack.c.b16 %v1007, %v1006
        %v1023 = vpack.c.b16 %v1009, %v1008
        %v1024 = vpack.c.b16 %v1011, %v1010
        %v1025 = vpack.c.b16 %v1013, %v1012
        %v1026 = vpack.c.b16 %v1015, %v1014
        %v1027 = vpack.c.b16 %v1017, %v1016
        %v1028 = vpack.c.b16 %v1019, %v1018
        %v1029 = vpack.c.b16 %v1021, %v1020
        %1038 = vmatprep.subr.bf16.mxu0 0
        %1039 = vmatpush1.bf16.msra.mxu0 %v1022
        %1040 = vmatprep.subr.bf16.mxu0 0
        %1041 = vmatpush1.bf16.msra.mxu0 %v1023
        %1042 = vmatprep.subr.bf16.mxu0 0
        %1043 = vmatpush1.bf16.msra.mxu0 %v1024
        %1044 = vmatprep.subr.bf16.mxu0 0
        %1045 = vmatpush1.bf16.msra.mxu0 %v1025
        %1046 = vmatprep.subr.bf16.mxu0 0
        %1047 = vmatpush1.bf16.msra.mxu0 %v1026
        %1048 = vmatprep.subr.bf16.mxu0 0
        %1049 = vmatpush1.bf16.msra.mxu0 %v1027
        %1050 = vmatprep.subr.bf16.mxu0 0
        %1051 = vmatpush1.bf16.msra.mxu0 %v1028
        %1052 = vmatprep.subr.bf16.mxu0 0
        %1053 = vmatpush1.bf16.msra.mxu0 %v1029
        %1054 = vmatprep.subr.bf16.mxu0 0
        %1055 = vmatpush1.bf16.msra.mxu0 0
        %1056 = vmatprep.subr.bf16.mxu0 0
        %1057 = vmatpush1.bf16.msra.mxu0 0
        %1058 = vmatprep.subr.bf16.mxu0 0
        %1059 = vmatpush1.bf16.msra.mxu0 0
        %1060 = vmatprep.subr.bf16.mxu0 0
        %1061 = vmatpush1.bf16.msra.mxu0 0
        %1062 = vmatprep.subr.bf16.mxu0 0
        %1063 = vmatpush1.bf16.msra.mxu0 0
        %1064 = vmatprep.subr.bf16.mxu0 0
        %1065 = vmatpush1.bf16.msra.mxu0 0
        %1066 = vmatprep.subr.bf16.mxu0 0
        %1067 = vmatpush1.bf16.msra.mxu0 0
        %1068 = vmatprep.subr.bf16.mxu0 0
        %1069 = vmatpush1.bf16.msra.mxu0 0
        %1070 = vmatprep.mubr.bf16.mxu0 0
        %1071 = vmatmul.mubr.bf16.gmra.mrb[0].mxu0 %v966
        %v1072 = vpop.f32.mrb[0].mxu0
        %v1073 = vadd.f32 0.0, %v1072
        %v1074 = vpop.f32.mrb[0].mxu0
        %v1075 = vpop.f32.mrb[0].mxu0
        %v1076 = vadd.f32 0.0, %v1075
        %v1077 = vpop.f32.mrb[0].mxu0
        %1078 = vmatprep.mubr.bf16.mxu0 0
        %1079 = vmatmul.mubr.bf16.gmra.mrb[0].mxu0 %v967
        %v1080 = vpop.f32.mrb[0].mxu0
        %v1081 = vadd.f32 0.0, %v1080
        %v1082 = vpop.f32.mrb[0].mxu0
        %v1083 = vpop.f32.mrb[0].mxu0
        %v1084 = vadd.f32 0.0, %v1083
        %v1085 = vpop.f32.mrb[0].mxu0
        %1086 = vmatprep.mubr.bf16.mxu0 0
        %1087 = vmatmul.mubr.bf16.gmra.mrb[0].mxu0 %v968
        %v1088 = vpop.f32.mrb[0].mxu0
        %v1089 = vadd.f32 0.0, %v1088
        %v1090 = vpop.f32.mrb[0].mxu0
        %v1091 = vpop.f32.mrb[0].mxu0
        %v1092 = vadd.f32 0.0, %v1091
        %v1093 = vpop.f32.mrb[0].mxu0
        %1094 = vmatprep.mubr.bf16.mxu0 0
        %1095 = vmatmul.mubr.bf16.gmra.mrb[0].mxu0 %v969
        %v1096 = vpop.f32.mrb[0].mxu0
        %v1097 = vadd.f32 0.0, %v1096
        %v1098 = vpop.f32.mrb[0].mxu0
        %v1099 = vpop.f32.mrb[0].mxu0
        %v1100 = vadd.f32 0.0, %v1099
        %v1101 = vpop.f32.mrb[0].mxu0
        %1102 = vmatprep.mubr.bf16.mxu0 0
        %1103 = vmatmul.mubr.bf16.gmra.mrb[0].mxu0 %v970
        %v1104 = vpop.f32.mrb[0].mxu0
        %v1105 = vadd.f32 0.0, %v1104
        %v1106 = vpop.f32.mrb[0].mxu0
        %v1107 = vpop.f32.mrb[0].mxu0
        %v1108 = vadd.f32 0.0, %v1107
        %v1109 = vpop.f32.mrb[0].mxu0
        %1110 = vmatprep.mubr.bf16.mxu0 0
        %1111 = vmatmul.mubr.bf16.gmra.mrb[0].mxu0 %v971
        %v1112 = vpop.f32.mrb[0].mxu0
        %v1113 = vadd.f32 0.0, %v1112
        %v1114 = vpop.f32.mrb[0].mxu0
        %v1115 = vpop.f32.mrb[0].mxu0
        %v1116 = vadd.f32 0.0, %v1115
        %v1117 = vpop.f32.mrb[0].mxu0
        %1118 = vmatprep.mubr.bf16.mxu0 0
        %1119 = vmatmul.mubr.bf16.gmra.mrb[0].mxu0 %v972
        %v1120 = vpop.f32.mrb[0].mxu0
        %v1121 = vadd.f32 0.0, %v1120
        %v1122 = vpop.f32.mrb[0].mxu0
        %v1123 = vpop.f32.mrb[0].mxu0
        %v1124 = vadd.f32 0.0, %v1123
        %v1125 = vpop.f32.mrb[0].mxu0
        %1126 = vmatprep.mubr.bf16.mxu0 0
        %1127 = vmatmul.mubr.bf16.gmra.mrb[0].mxu0 %v973
        %v1128 = vpop.f32.mrb[0].mxu0
        %v1129 = vadd.f32 0.0, %v1128
        %v1130 = vpop.f32.mrb[0].mxu0
        %v1131 = vpop.f32.mrb[0].mxu0
        %v1132 = vadd.f32 0.0, %v1131
        %v1133 = vpop.f32.mrb[0].mxu0
        %1134 = vdwg.mxu0
        %v1135 = vld [vmem:[%s459] sm:$0xff]
        %v1137 = vcombine.high %v1135, %v1135
        %v1139 = vunpack.c.l.s4 1966171168
        %v1140 = vunpack.c.0.s8 %v1139
        %v1141 = vlaneseq
        %v1142 = vshrl.u32 %v1141, 7
        %v1143 = vsub.s32 %v1140, %v1142
        %v1144 = vrot.slane %v1135, %v1143
        %v1146 = vunpack.c.l.s4 1966171168
        %v1147 = vunpack.c.0.s8 %v1146
        %v1148 = vlaneseq
        %v1149 = vshrl.u32 %v1148, 7
        %v1150 = vsub.s32 %v1147, %v1149
        %v1151 = vrot.slane %v1137, %v1150
        %v1152 = vcombine.high %v1144, %v1144
        %v1153 = vcombine.high %v1151, %v1151
        %v1155 = vunpack.c.l.s4 1966171168
        %v1156 = vunpack.c.0.s8 %v1155
        %v1157 = vlaneseq
        %v1158 = vshrl.u32 %v1157, 7
        %v1159 = vsub.s32 %v1156, %v1158
        %v1160 = vrot.slane %v1144, %v1159
        %v1162 = vunpack.c.l.s4 1966171168
        %v1163 = vunpack.c.0.s8 %v1162
        %v1164 = vlaneseq
        %v1165 = vshrl.u32 %v1164, 7
        %v1166 = vsub.s32 %v1163, %v1165
        %v1167 = vrot.slane %v1151, %v1166
        %v1169 = vunpack.c.l.s4 1966171168
        %v1170 = vunpack.c.0.s8 %v1169
        %v1171 = vlaneseq
        %v1172 = vshrl.u32 %v1171, 7
        %v1173 = vsub.s32 %v1170, %v1172
        %v1174 = vrot.slane %v1152, %v1173
        %v1176 = vunpack.c.l.s4 1966171168
        %v1177 = vunpack.c.0.s8 %v1176
        %v1178 = vlaneseq
        %v1179 = vshrl.u32 %v1178, 7
        %v1180 = vsub.s32 %v1177, %v1179
        %v1181 = vrot.slane %v1153, %v1180
        %v1182 = vcombine.high %v1160, %v1160
        %v1183 = vcombine.high %v1167, %v1167
        %v1184 = vcombine.high %v1174, %v1174
        %v1185 = vcombine.high %v1181, %v1181
        %v1186 = vlaneseq
        %v1187 = vshrl.u32 %v1186, 7
        %v1188 = vsub.s32 0, %v1187
        %v1189 = vrot.slane %v1160, %v1188
        %v1190 = vlaneseq
        %v1191 = vshrl.u32 %v1190, 7
        %v1192 = vsub.s32 0, %v1191
        %v1193 = vrot.slane %v1174, %v1192
        %v1194 = vlaneseq
        %v1195 = vshrl.u32 %v1194, 7
        %v1196 = vsub.s32 0, %v1195
        %v1197 = vrot.slane %v1182, %v1196
        %v1198 = vlaneseq
        %v1199 = vshrl.u32 %v1198, 7
        %v1200 = vsub.s32 0, %v1199
        %v1201 = vrot.slane %v1184, %v1200
        %v1202 = vlaneseq
        %v1203 = vshrl.u32 %v1202, 7
        %v1204 = vsub.s32 0, %v1203
        %v1205 = vrot.slane %v1167, %v1204
        %v1206 = vlaneseq
        %v1207 = vshrl.u32 %v1206, 7
        %v1208 = vsub.s32 0, %v1207
        %v1209 = vrot.slane %v1181, %v1208
        %v1210 = vlaneseq
        %v1211 = vshrl.u32 %v1210, 7
        %v1212 = vsub.s32 0, %v1211
        %v1213 = vrot.slane %v1183, %v1212
        %v1214 = vlaneseq
        %v1215 = vshrl.u32 %v1214, 7
        %v1216 = vsub.s32 0, %v1215
        %v1217 = vrot.slane %v1185, %v1216
        %v1226 = vadd.f32 %v1073, %v1189
        %v1227 = vadd.f32 %v1076, %v1189
        %v1228 = vadd.f32 %v1081, %v1193
        %v1229 = vadd.f32 %v1084, %v1193
        %v1230 = vadd.f32 %v1089, %v1197
        %v1231 = vadd.f32 %v1092, %v1197
        %v1232 = vadd.f32 %v1097, %v1201
        %v1233 = vadd.f32 %v1100, %v1201
        %v1234 = vadd.f32 %v1105, %v1205
        %v1235 = vadd.f32 %v1108, %v1205
        %v1236 = vadd.f32 %v1113, %v1209
        %v1237 = vadd.f32 %v1116, %v1209
        %v1238 = vadd.f32 %v1121, %v1213
        %v1239 = vadd.f32 %v1124, %v1213
        %v1240 = vadd.f32 %v1129, %v1217
        %v1241 = vadd.f32 %v1132, %v1217
        %v1242 = vpack.c.bf16 %v1227, %v1226
        %v1243 = vpack.c.bf16 %v1229, %v1228
        %v1244 = vpack.c.bf16 %v1231, %v1230
        %v1245 = vpack.c.bf16 %v1233, %v1232
        %v1246 = vpack.c.bf16 %v1235, %v1234
        %v1247 = vpack.c.bf16 %v1237, %v1236
        %v1248 = vpack.c.bf16 %v1239, %v1238
        %v1249 = vpack.c.bf16 %v1241, %v1240
        %v1250 = vld [vmem:[%s7] sm:$0x1]
        %v1252 = vlaneseq
        %v1253 = vshrl.u32 %v1252, 7
        %v1254 = vsub.s32 0, %v1253
        %v1255 = vrot.slane %v1250, %v1254
        %1257 = vmatprep.subr.bf16.mxu0 0
        %1258 = vmatpush1.bf16.msra.mxu0 %v1242
        %1259 = vmatprep.subr.bf16.mxu0 0
        %1260 = vmatpush1.bf16.msra.mxu0 %v1243
        %1261 = vmatprep.subr.bf16.mxu0 0
        %1262 = vmatpush1.bf16.msra.mxu0 %v1244
        %1263 = vmatprep.subr.bf16.mxu0 0
        %1264 = vmatpush1.bf16.msra.mxu0 %v1245
        %1265 = vmatprep.subr.bf16.mxu0 0
        %1266 = vmatpush1.bf16.msra.mxu0 %v1246
        %1267 = vmatprep.subr.bf16.mxu0 0
        %1268 = vmatpush1.bf16.msra.mxu0 %v1247
        %1269 = vmatprep.subr.bf16.mxu0 0
        %1270 = vmatpush1.bf16.msra.mxu0 %v1248
        %1271 = vmatprep.subr.bf16.mxu0 0
        %1272 = vmatpush1.bf16.msra.mxu0 %v1249
        %1273 = vmatprep.subr.bf16.mxu0 0
        %1274 = vmatpush1.bf16.msra.mxu0 0
        %1275 = vmatprep.subr.bf16.mxu0 0
        %1276 = vmatpush1.bf16.msra.mxu0 0
        %1277 = vmatprep.subr.bf16.mxu0 0
        %1278 = vmatpush1.bf16.msra.mxu0 0
        %1279 = vmatprep.subr.bf16.mxu0 0
        %1280 = vmatpush1.bf16.msra.mxu0 0
        %1281 = vmatprep.subr.bf16.mxu0 0
        %1282 = vmatpush1.bf16.msra.mxu0 0
        %1283 = vmatprep.subr.bf16.mxu0 0
        %1284 = vmatpush1.bf16.msra.mxu0 0
        %1285 = vmatprep.subr.bf16.mxu0 0
        %1286 = vmatpush1.bf16.msra.mxu0 0
        %1287 = vmatprep.subr.bf16.mxu0 0
        %1288 = vmatpush1.bf16.msra.mxu0 0
        %1289 = vmatprep.mubr.bf16.mxu0 0
        %1290 = vmatmul.mubr.bf16.gmra.mrb[0].mxu0 %v821
        %v1291 = vpop.f32.mrb[0].mxu0
        %v1292 = vadd.f32 %v1255, %v1291
        %v1293 = vpop.f32.mrb[0].mxu0
        %v1294 = vpop.f32.mrb[0].mxu0
        %v1295 = vadd.f32 %v1255, %v1294
        %v1296 = vpop.f32.mrb[0].mxu0
        %1297 = vmatprep.mubr.bf16.mxu0 0
        %1298 = vmatmul.mubr.bf16.gmra.mrb[0].mxu0 %v822
        %v1299 = vpop.f32.mrb[0].mxu0
        %v1300 = vadd.f32 %v1255, %v1299
        %v1301 = vpop.f32.mrb[0].mxu0
        %v1302 = vpop.f32.mrb[0].mxu0
        %v1303 = vadd.f32 %v1255, %v1302
        %v1304 = vpop.f32.mrb[0].mxu0
        %1305 = vmatprep.mubr.bf16.mxu0 0
        %1306 = vmatmul.mubr.bf16.gmra.mrb[0].mxu0 %v823
        %v1307 = vpop.f32.mrb[0].mxu0
        %v1308 = vadd.f32 %v1255, %v1307
        %v1309 = vpop.f32.mrb[0].mxu0
        %v1310 = vpop.f32.mrb[0].mxu0
        %v1311 = vadd.f32 %v1255, %v1310
        %v1312 = vpop.f32.mrb[0].mxu0
        %1313 = vmatprep.mubr.bf16.mxu0 0
        %1314 = vmatmul.mubr.bf16.gmra.mrb[0].mxu0 %v824
        %v1315 = vpop.f32.mrb[0].mxu0
        %v1316 = vadd.f32 %v1255, %v1315
        %v1317 = vpop.f32.mrb[0].mxu0
        %v1318 = vpop.f32.mrb[0].mxu0
        %v1319 = vadd.f32 %v1255, %v1318
        %v1320 = vpop.f32.mrb[0].mxu0
        %1321 = vmatprep.mubr.bf16.mxu0 0
        %1322 = vmatmul.mubr.bf16.gmra.mrb[0].mxu0 %v825
        %v1323 = vpop.f32.mrb[0].mxu0
        %v1324 = vadd.f32 %v1255, %v1323
        %v1325 = vpop.f32.mrb[0].mxu0
        %v1326 = vpop.f32.mrb[0].mxu0
        %v1327 = vadd.f32 %v1255, %v1326
        %v1328 = vpop.f32.mrb[0].mxu0
        %1329 = vmatprep.mubr.bf16.mxu0 0
        %1330 = vmatmul.mubr.bf16.gmra.mrb[0].mxu0 %v826
        %v1331 = vpop.f32.mrb[0].mxu0
        %v1332 = vadd.f32 %v1255, %v1331
        %v1333 = vpop.f32.mrb[0].mxu0
        %v1334 = vpop.f32.mrb[0].mxu0
        %v1335 = vadd.f32 %v1255, %v1334
        %v1336 = vpop.f32.mrb[0].mxu0
        %1337 = vmatprep.mubr.bf16.mxu0 0
        %1338 = vmatmul.mubr.bf16.gmra.mrb[0].mxu0 %v827
        %v1339 = vpop.f32.mrb[0].mxu0
        %v1340 = vadd.f32 %v1255, %v1339
        %v1341 = vpop.f32.mrb[0].mxu0
        %v1342 = vpop.f32.mrb[0].mxu0
        %v1343 = vadd.f32 %v1255, %v1342
        %v1344 = vpop.f32.mrb[0].mxu0
        %1345 = vmatprep.mubr.bf16.mxu0 0
        %1346 = vmatmul.mubr.bf16.gmra.mrb[0].mxu0 %v828
        %v1347 = vpop.f32.mrb[0].mxu0
        %v1348 = vadd.f32 %v1255, %v1347
        %v1349 = vpop.f32.mrb[0].mxu0
        %v1350 = vpop.f32.mrb[0].mxu0
        %v1351 = vadd.f32 %v1255, %v1350
        %v1352 = vpop.f32.mrb[0].mxu0
        %1353 = vdwg.mxu0
        %v1354 = vmul.f32 %v1292, 0.01
        %v1355 = vmul.f32 %v1295, 0.01
        %v1356 = vmul.f32 %v1300, 0.01
        %v1357 = vmul.f32 %v1303, 0.01
        %v1358 = vmul.f32 %v1308, 0.01
        %v1359 = vmul.f32 %v1311, 0.01
        %v1360 = vmul.f32 %v1316, 0.01
        %v1361 = vmul.f32 %v1319, 0.01
        %v1362 = vmul.f32 %v1324, 0.01
        %v1363 = vmul.f32 %v1327, 0.01
        %v1364 = vmul.f32 %v1332, 0.01
        %v1365 = vmul.f32 %v1335, 0.01
        %v1366 = vmul.f32 %v1340, 0.01
        %v1367 = vmul.f32 %v1343, 0.01
        %v1368 = vmul.f32 %v1348, 0.01
        %v1369 = vmul.f32 %v1351, 0.01
        %v1370 = vmax.f32 %v1292, %v1354
        %v1371 = vmax.f32 %v1295, %v1355
        %v1372 = vmax.f32 %v1300, %v1356
        %v1373 = vmax.f32 %v1303, %v1357
        %v1374 = vmax.f32 %v1308, %v1358
        %v1375 = vmax.f32 %v1311, %v1359
        %v1376 = vmax.f32 %v1316, %v1360
        %v1377 = vmax.f32 %v1319, %v1361
        %v1378 = vmax.f32 %v1324, %v1362
        %v1379 = vmax.f32 %v1327, %v1363
        %v1380 = vmax.f32 %v1332, %v1364
        %v1381 = vmax.f32 %v1335, %v1365
        %v1382 = vmax.f32 %v1340, %v1366
        %v1383 = vmax.f32 %v1343, %v1367
        %v1384 = vmax.f32 %v1348, %v1368
        %v1385 = vmax.f32 %v1351, %v1369
        %v1386 = vpack.c.bf16 %v1371, %v1370
        %v1387 = vpack.c.bf16 %v1373, %v1372
        %v1388 = vpack.c.bf16 %v1375, %v1374
        %v1389 = vpack.c.bf16 %v1377, %v1376
        %v1390 = vpack.c.bf16 %v1379, %v1378
        %v1391 = vpack.c.bf16 %v1381, %v1380
        %v1392 = vpack.c.bf16 %v1383, %v1382
        %v1393 = vpack.c.bf16 %v1385, %v1384
        %v1394 = vld [vmem:[#allocation13] sm:$0xf]
        %v1395 = vld [vmem:[#allocation13 + $0x4] sm:$0xf]
        %v1396 = vld [vmem:[#allocation13 + $0x8] sm:$0xf]
        %v1397 = vld [vmem:[#allocation13 + $0xc] sm:$0xf]
        %v1398 = vld [vmem:[#allocation13 + $0x10] sm:$0xf]
        %v1399 = vld [vmem:[#allocation13 + $0x14] sm:$0xf]
        %v1400 = vld [vmem:[#allocation13 + $0x18] sm:$0xf]
        %v1401 = vld [vmem:[#allocation13 + $0x1c] sm:$0xf]
        %v1402 = vld [vmem:[#allocation13 + $0x20] sm:$0xf]
        %v1403 = vld [vmem:[#allocation13 + $0x24] sm:$0xf]
        %v1404 = vld [vmem:[#allocation13 + $0x28] sm:$0xf]
        %v1405 = vld [vmem:[#allocation13 + $0x2c] sm:$0xf]
        %v1406 = vld [vmem:[#allocation13 + $0x30] sm:$0xf]
        %v1407 = vld [vmem:[#allocation13 + $0x34] sm:$0xf]
        %v1408 = vld [vmem:[#allocation13 + $0x38] sm:$0xf]
        %v1409 = vld [vmem:[#allocation13 + $0x3c] sm:$0xf]
        %v1426 = vunpack.c.l.b16 %v1394
        %v1427 = vunpack.c.l.b16 %v1395
        %v1428 = vunpack.c.l.b16 %v1396
        %v1429 = vunpack.c.l.b16 %v1397
        %v1430 = vunpack.c.l.b16 %v1398
        %v1431 = vunpack.c.l.b16 %v1399
        %v1432 = vunpack.c.l.b16 %v1400
        %v1433 = vunpack.c.l.b16 %v1401
        %v1434 = vunpack.c.l.b16 %v1402
        %v1435 = vunpack.c.l.b16 %v1403
        %v1436 = vunpack.c.l.b16 %v1404
        %v1437 = vunpack.c.l.b16 %v1405
        %v1438 = vunpack.c.l.b16 %v1406
        %v1439 = vunpack.c.l.b16 %v1407
        %v1440 = vunpack.c.l.b16 %v1408
        %v1441 = vunpack.c.l.b16 %v1409
        %v1442 = vpack.c.b16 %v1427, %v1426
        %v1443 = vpack.c.b16 %v1429, %v1428
        %v1444 = vpack.c.b16 %v1431, %v1430
        %v1445 = vpack.c.b16 %v1433, %v1432
        %v1446 = vpack.c.b16 %v1435, %v1434
        %v1447 = vpack.c.b16 %v1437, %v1436
        %v1448 = vpack.c.b16 %v1439, %v1438
        %v1449 = vpack.c.b16 %v1441, %v1440
        %1458 = vmatprep.subr.bf16.mxu0 0
        %1459 = vmatpush1.bf16.msra.mxu0 %v1442
        %1460 = vmatprep.subr.bf16.mxu0 0
        %1461 = vmatpush1.bf16.msra.mxu0 %v1443
        %1462 = vmatprep.subr.bf16.mxu0 0
        %1463 = vmatpush1.bf16.msra.mxu0 %v1444
        %1464 = vmatprep.subr.bf16.mxu0 0
        %1465 = vmatpush1.bf16.msra.mxu0 %v1445
        %1466 = vmatprep.subr.bf16.mxu0 0
        %1467 = vmatpush1.bf16.msra.mxu0 %v1446
        %1468 = vmatprep.subr.bf16.mxu0 0
        %1469 = vmatpush1.bf16.msra.mxu0 %v1447
        %1470 = vmatprep.subr.bf16.mxu0 0
        %1471 = vmatpush1.bf16.msra.mxu0 %v1448
        %1472 = vmatprep.subr.bf16.mxu0 0
        %1473 = vmatpush1.bf16.msra.mxu0 %v1449
        %1474 = vmatprep.subr.bf16.mxu0 0
        %1475 = vmatpush1.bf16.msra.mxu0 0
        %1476 = vmatprep.subr.bf16.mxu0 0
        %1477 = vmatpush1.bf16.msra.mxu0 0
        %1478 = vmatprep.subr.bf16.mxu0 0
        %1479 = vmatpush1.bf16.msra.mxu0 0
        %1480 = vmatprep.subr.bf16.mxu0 0
        %1481 = vmatpush1.bf16.msra.mxu0 0
        %1482 = vmatprep.subr.bf16.mxu0 0
        %1483 = vmatpush1.bf16.msra.mxu0 0
        %1484 = vmatprep.subr.bf16.mxu0 0
        %1485 = vmatpush1.bf16.msra.mxu0 0
        %1486 = vmatprep.subr.bf16.mxu0 0
        %1487 = vmatpush1.bf16.msra.mxu0 0
        %1488 = vmatprep.subr.bf16.mxu0 0
        %1489 = vmatpush1.bf16.msra.mxu0 0
        %1490 = vmatprep.mubr.bf16.mxu0 0
        %1491 = vmatmul.mubr.bf16.gmra.mrb[0].mxu0 %v1386
        %v1492 = vpop.f32.mrb[0].mxu0
        %v1493 = vadd.f32 0.0, %v1492
        %v1494 = vpop.f32.mrb[0].mxu0
        %v1495 = vpop.f32.mrb[0].mxu0
        %v1496 = vadd.f32 0.0, %v1495
        %v1497 = vpop.f32.mrb[0].mxu0
        %1498 = vmatprep.mubr.bf16.mxu0 0
        %1499 = vmatmul.mubr.bf16.gmra.mrb[0].mxu0 %v1387
        %v1500 = vpop.f32.mrb[0].mxu0
        %v1501 = vadd.f32 0.0, %v1500
        %v1502 = vpop.f32.mrb[0].mxu0
        %v1503 = vpop.f32.mrb[0].mxu0
        %v1504 = vadd.f32 0.0, %v1503
        %v1505 = vpop.f32.mrb[0].mxu0
        %1506 = vmatprep.mubr.bf16.mxu0 0
        %1507 = vmatmul.mubr.bf16.gmra.mrb[0].mxu0 %v1388
        %v1508 = vpop.f32.mrb[0].mxu0
        %v1509 = vadd.f32 0.0, %v1508
        %v1510 = vpop.f32.mrb[0].mxu0
        %v1511 = vpop.f32.mrb[0].mxu0
        %v1512 = vadd.f32 0.0, %v1511
        %v1513 = vpop.f32.mrb[0].mxu0
        %1514 = vmatprep.mubr.bf16.mxu0 0
        %1515 = vmatmul.mubr.bf16.gmra.mrb[0].mxu0 %v1389
        %v1516 = vpop.f32.mrb[0].mxu0
        %v1517 = vadd.f32 0.0, %v1516
        %v1518 = vpop.f32.mrb[0].mxu0
        %v1519 = vpop.f32.mrb[0].mxu0
        %v1520 = vadd.f32 0.0, %v1519
        %v1521 = vpop.f32.mrb[0].mxu0
        %1522 = vmatprep.mubr.bf16.mxu0 0
        %1523 = vmatmul.mubr.bf16.gmra.mrb[0].mxu0 %v1390
        %v1524 = vpop.f32.mrb[0].mxu0
        %v1525 = vadd.f32 0.0, %v1524
        %v1526 = vpop.f32.mrb[0].mxu0
        %v1527 = vpop.f32.mrb[0].mxu0
        %v1528 = vadd.f32 0.0, %v1527
        %v1529 = vpop.f32.mrb[0].mxu0
        %1530 = vmatprep.mubr.bf16.mxu0 0
        %1531 = vmatmul.mubr.bf16.gmra.mrb[0].mxu0 %v1391
        %v1532 = vpop.f32.mrb[0].mxu0
        %v1533 = vadd.f32 0.0, %v1532
        %v1534 = vpop.f32.mrb[0].mxu0
        %v1535 = vpop.f32.mrb[0].mxu0
        %v1536 = vadd.f32 0.0, %v1535
        %v1537 = vpop.f32.mrb[0].mxu0
        %1538 = vmatprep.mubr.bf16.mxu0 0
        %1539 = vmatmul.mubr.bf16.gmra.mrb[0].mxu0 %v1392
        %v1540 = vpop.f32.mrb[0].mxu0
        %v1541 = vadd.f32 0.0, %v1540
        %v1542 = vpop.f32.mrb[0].mxu0
        %v1543 = vpop.f32.mrb[0].mxu0
        %v1544 = vadd.f32 0.0, %v1543
        %v1545 = vpop.f32.mrb[0].mxu0
        %1546 = vmatprep.mubr.bf16.mxu0 0
        %1547 = vmatmul.mubr.bf16.gmra.mrb[0].mxu0 %v1393
        %v1548 = vpop.f32.mrb[0].mxu0
        %v1549 = vadd.f32 0.0, %v1548
        %v1550 = vpop.f32.mrb[0].mxu0
        %v1551 = vpop.f32.mrb[0].mxu0
        %v1552 = vadd.f32 0.0, %v1551
        %v1553 = vpop.f32.mrb[0].mxu0
        %1554 = vdwg.mxu0
        %v1555 = vld [vmem:[%s468] sm:$0xff]
        %v1557 = vcombine.high %v1555, %v1555
        %v1559 = vunpack.c.l.s4 1966171168
        %v1560 = vunpack.c.0.s8 %v1559
        %v1561 = vlaneseq
        %v1562 = vshrl.u32 %v1561, 7
        %v1563 = vsub.s32 %v1560, %v1562
        %v1564 = vrot.slane %v1555, %v1563
        %v1566 = vunpack.c.l.s4 1966171168
        %v1567 = vunpack.c.0.s8 %v1566
        %v1568 = vlaneseq
        %v1569 = vshrl.u32 %v1568, 7
        %v1570 = vsub.s32 %v1567, %v1569
        %v1571 = vrot.slane %v1557, %v1570
        %v1572 = vcombine.high %v1564, %v1564
        %v1573 = vcombine.high %v1571, %v1571
        %v1575 = vunpack.c.l.s4 1966171168
        %v1576 = vunpack.c.0.s8 %v1575
        %v1577 = vlaneseq
        %v1578 = vshrl.u32 %v1577, 7
        %v1579 = vsub.s32 %v1576, %v1578
        %v1580 = vrot.slane %v1564, %v1579
        %v1582 = vunpack.c.l.s4 1966171168
        %v1583 = vunpack.c.0.s8 %v1582
        %v1584 = vlaneseq
        %v1585 = vshrl.u32 %v1584, 7
        %v1586 = vsub.s32 %v1583, %v1585
        %v1587 = vrot.slane %v1571, %v1586
        %v1589 = vunpack.c.l.s4 1966171168
        %v1590 = vunpack.c.0.s8 %v1589
        %v1591 = vlaneseq
        %v1592 = vshrl.u32 %v1591, 7
        %v1593 = vsub.s32 %v1590, %v1592
        %v1594 = vrot.slane %v1572, %v1593
        %v1596 = vunpack.c.l.s4 1966171168
        %v1597 = vunpack.c.0.s8 %v1596
        %v1598 = vlaneseq
        %v1599 = vshrl.u32 %v1598, 7
        %v1600 = vsub.s32 %v1597, %v1599
        %v1601 = vrot.slane %v1573, %v1600
        %v1602 = vcombine.high %v1580, %v1580
        %v1603 = vcombine.high %v1587, %v1587
        %v1604 = vcombine.high %v1594, %v1594
        %v1605 = vcombine.high %v1601, %v1601
        %v1606 = vlaneseq
        %v1607 = vshrl.u32 %v1606, 7
        %v1608 = vsub.s32 0, %v1607
        %v1609 = vrot.slane %v1580, %v1608
        %v1610 = vlaneseq
        %v1611 = vshrl.u32 %v1610, 7
        %v1612 = vsub.s32 0, %v1611
        %v1613 = vrot.slane %v1594, %v1612
        %v1614 = vlaneseq
        %v1615 = vshrl.u32 %v1614, 7
        %v1616 = vsub.s32 0, %v1615
        %v1617 = vrot.slane %v1602, %v1616
        %v1618 = vlaneseq
        %v1619 = vshrl.u32 %v1618, 7
        %v1620 = vsub.s32 0, %v1619
        %v1621 = vrot.slane %v1604, %v1620
        %v1622 = vlaneseq
        %v1623 = vshrl.u32 %v1622, 7
        %v1624 = vsub.s32 0, %v1623
        %v1625 = vrot.slane %v1587, %v1624
        %v1626 = vlaneseq
        %v1627 = vshrl.u32 %v1626, 7
        %v1628 = vsub.s32 0, %v1627
        %v1629 = vrot.slane %v1601, %v1628
        %v1630 = vlaneseq
        %v1631 = vshrl.u32 %v1630, 7
        %v1632 = vsub.s32 0, %v1631
        %v1633 = vrot.slane %v1603, %v1632
        %v1634 = vlaneseq
        %v1635 = vshrl.u32 %v1634, 7
        %v1636 = vsub.s32 0, %v1635
        %v1637 = vrot.slane %v1605, %v1636
        %v1646 = vadd.f32 %v1493, %v1609
        %v1647 = vadd.f32 %v1496, %v1609
        %v1648 = vadd.f32 %v1501, %v1613
        %v1649 = vadd.f32 %v1504, %v1613
        %v1650 = vadd.f32 %v1509, %v1617
        %v1651 = vadd.f32 %v1512, %v1617
        %v1652 = vadd.f32 %v1517, %v1621
        %v1653 = vadd.f32 %v1520, %v1621
        %v1654 = vadd.f32 %v1525, %v1625
        %v1655 = vadd.f32 %v1528, %v1625
        %v1656 = vadd.f32 %v1533, %v1629
        %v1657 = vadd.f32 %v1536, %v1629
        %v1658 = vadd.f32 %v1541, %v1633
        %v1659 = vadd.f32 %v1544, %v1633
        %v1660 = vadd.f32 %v1549, %v1637
        %v1661 = vadd.f32 %v1552, %v1637
        %v1662 = vld [vmem:[%s9] sm:$0x1]
        %v1664 = vlaneseq
        %v1665 = vshrl.u32 %v1664, 7
        %v1666 = vsub.s32 0, %v1665
        %v1667 = vrot.slane %v1662, %v1666
        %v1669 = vadd.f32 %v1646, %v1667
        %v1670 = vadd.f32 %v1647, %v1667
        %v1671 = vadd.f32 %v1648, %v1667
        %v1672 = vadd.f32 %v1649, %v1667
        %v1673 = vadd.f32 %v1650, %v1667
        %v1674 = vadd.f32 %v1651, %v1667
        %v1675 = vadd.f32 %v1652, %v1667
        %v1676 = vadd.f32 %v1653, %v1667
        %v1677 = vadd.f32 %v1654, %v1667
        %v1678 = vadd.f32 %v1655, %v1667
        %v1679 = vadd.f32 %v1656, %v1667
        %v1680 = vadd.f32 %v1657, %v1667
        %v1681 = vadd.f32 %v1658, %v1667
        %v1682 = vadd.f32 %v1659, %v1667
        %v1683 = vadd.f32 %v1660, %v1667
        %v1684 = vadd.f32 %v1661, %v1667
        %v1685 = vmul.f32 %v1669, 0.01
        %v1686 = vmul.f32 %v1670, 0.01
        %v1687 = vmul.f32 %v1671, 0.01
        %v1688 = vmul.f32 %v1672, 0.01
        %v1689 = vmul.f32 %v1673, 0.01
        %v1690 = vmul.f32 %v1674, 0.01
        %v1691 = vmul.f32 %v1675, 0.01
        %v1692 = vmul.f32 %v1676, 0.01
        %v1693 = vmul.f32 %v1677, 0.01
        %v1694 = vmul.f32 %v1678, 0.01
        %v1695 = vmul.f32 %v1679, 0.01
        %v1696 = vmul.f32 %v1680, 0.01
        %v1697 = vmul.f32 %v1681, 0.01
        %v1698 = vmul.f32 %v1682, 0.01
        %v1699 = vmul.f32 %v1683, 0.01
        %v1700 = vmul.f32 %v1684, 0.01
        %v1701 = vmax.f32 %v1669, %v1685
        %v1702 = vmax.f32 %v1670, %v1686
        %v1703 = vmax.f32 %v1671, %v1687
        %v1704 = vmax.f32 %v1672, %v1688
        %v1705 = vmax.f32 %v1673, %v1689
        %v1706 = vmax.f32 %v1674, %v1690
        %v1707 = vmax.f32 %v1675, %v1691
        %v1708 = vmax.f32 %v1676, %v1692
        %v1709 = vmax.f32 %v1677, %v1693
        %v1710 = vmax.f32 %v1678, %v1694
        %v1711 = vmax.f32 %v1679, %v1695
        %v1712 = vmax.f32 %v1680, %v1696
        %v1713 = vmax.f32 %v1681, %v1697
        %v1714 = vmax.f32 %v1682, %v1698
        %v1715 = vmax.f32 %v1683, %v1699
        %v1716 = vmax.f32 %v1684, %v1700
        %1717 = vst [vmem:[%s531] sm:$0xff] %v1701
        %1718 = vst [vmem:[%s531 + $0x8] sm:$0xff] %v1702
        %1719 = vst [vmem:[%s531 + $0x10] sm:$0xff] %v1703
        %1720 = vst [vmem:[%s531 + $0x18] sm:$0xff] %v1704
        %1721 = vst [vmem:[%s531 + $0x20] sm:$0xff] %v1705
        %1722 = vst [vmem:[%s531 + $0x28] sm:$0xff] %v1706
        %1723 = vst [vmem:[%s531 + $0x30] sm:$0xff] %v1707
        %1724 = vst [vmem:[%s531 + $0x38] sm:$0xff] %v1708
        %1725 = vst [vmem:[%s531 + $0x40] sm:$0xff] %v1709
        %1726 = vst [vmem:[%s531 + $0x48] sm:$0xff] %v1710
        %1727 = vst [vmem:[%s531 + $0x50] sm:$0xff] %v1711
        %1728 = vst [vmem:[%s531 + $0x58] sm:$0xff] %v1712
        %1729 = vst [vmem:[%s531 + $0x60] sm:$0xff] %v1713
        %1730 = vst [vmem:[%s531 + $0x68] sm:$0xff] %v1714
        %1731 = vst [vmem:[%s531 + $0x70] sm:$0xff] %v1715
        %1732 = vst [vmem:[%s531 + $0x78] sm:$0xff] %v1716
        %s1733 = sand.u32 %s272, 1
        %s1734 = scalar_lea.sflag [#allocation4], %s1733
        %s1735 = sand.u32 %s272, 1
        %s1736 = smul.addr %s1735, 128
        %s1737 = scalar_lea.vmem [#allocation14], %s1736
        // Predicated region
        $region89: #{propagation_gcn_layer.1} parent=59 // pred_check
          %p1738 = pneg %p282
        $region90: #{propagation_gcn_layer.1} parent=59 // pred_check_branch
          %1740 = sbr.rel (%p1738) target = $region92
        $region91: #{propagation_gcn_layer.1} parent=59 // pred_region
          %s1742 = ssub.s32 2048, 2048
          %1743 = vsyncadd %s1734, %s1742
          %s1744 = smul.addr %s34, 16
          %s1745 = smul.addr %s1744, 128
          %s1746 = scalar_lea.hbm %s10, %s1745
          %s1747 = sshll.u32 %s1737, 4
          %s1748 = int_to_ptr.vmem [resolvable:$true] %s1747
          %1753 = dma.vmem_to_hbm [thread:$0]  %s1748, 2048, %s1746, %s1734, 128, 128, 8
        $region92: #{propagation_gcn_layer.1} parent=59 // pred_fallthru
          _
      $region60: #{propagation_gcn_layer.1} parent=5 // pred_fallthru
        _
      %p1754 = scmp.le.s32.totalorder 2, %s29
      // Predicated region
      $region93: #{propagation_gcn_layer.1} parent=5 // pred_check
        %p1755 = pneg %p1754
      $region94: #{propagation_gcn_layer.1} parent=5 // pred_check_branch
        %1757 = sbr.rel (%p1755) target = $region96
      $region95: #{propagation_gcn_layer.1} parent=5 // pred_region
        %s1758 = ssub.s32 %s29, 2
        // Predicated region
        $region97: #{propagation_gcn_layer.1} parent=95 // pred_check
          %p1759 = pneg %p288
        $region98: #{propagation_gcn_layer.1} parent=95 // pred_check_branch
          %1761 = sbr.rel (%p1759) target = $region100
        $region99: #{propagation_gcn_layer.1} parent=95 // pred_region
          %s1762 = sand.u32 %s273, 1
          %s1763 = scalar_lea.sflag [#allocation4], %s1762
          %s1764 = sand.u32 %s273, 1
          %s1765 = smul.addr %s1764, 128
          %s1766 = scalar_lea.vmem [#allocation14], %s1765
          %1767 = dma.done %s1763, 2048
        $region100: #{propagation_gcn_layer.1} parent=95 // pred_fallthru
          _
      $region96: #{propagation_gcn_layer.1} parent=5 // pred_fallthru
        _
    $region6: #{propagation_gcn_layer.1} parent=1 // loop_footer
      %s33 = sadd.s32 1, %s29
    $region7: #{propagation_gcn_layer.1} parent=1 // loop_footer_branch
      %28 = sbr.rel target = $region3
    $region8: #{propagation_gcn_layer.1} parent=1 // loop_exit
      _
    %1768 = vsyncpa [#allocation3], 1
    %s1769 = scalar_lea.sflag [#allocation3], 1
    %1770 = vsyncpa %s1769, 1
    %1771 = vsyncpa [#allocation6], 1
    %s1772 = scalar_lea.sflag [#allocation6], 1
    %1773 = vsyncpa %s1772, 1
    %1774 = vsyncpa [#allocation9], 1
    %s1775 = scalar_lea.sflag [#allocation9], 1
    %1776 = vsyncpa %s1775, 1
    %1777 = vsyncpa [#allocation12], 1
    %1778 = vsyncpa [#allocation4], 1
    %s1779 = scalar_lea.sflag [#allocation4], 1
    %1780 = vsyncpa %s1779, 1

</llo_original>
